<compile_context>
chip_gen: v7x
topology: tpu7x:2x2x1
jax: 0.10.0
libtpu: 0.0.40
codegen_flags: <defaults>
</compile_context>

<pallas_src>
import functools

import jax
import jax.numpy as jnp
from jax.experimental import pallas as pl
from jax.experimental.pallas import tpu as pltpu


# ---------------------------------------------------------------------------
# VMEM capacity, resolved lazily per backend (v7x: 64 MiB, v4/v5e/v6e: 128 MiB)
# ---------------------------------------------------------------------------
@functools.lru_cache(maxsize=None)
def _vmem_capacity_bytes():
    try:
        cap = int(getattr(pltpu.get_tpu_info(), "vmem_capacity_bytes", 0) or 0)
        if cap > 0:
            return cap
    except Exception:
        pass
    try:
        kind = jax.devices()[0].device_kind.lower()
    except Exception:
        kind = ""
    if any(v in kind for v in ("v4", "v5", "v6")):
        return 128 * 1024 * 1024
    return 64 * 1024 * 1024                      # v7x / unknown: be conservative


def _vmem_budget_bytes():                        # tile-selection budget
    return int(_vmem_capacity_bytes() * 7 // 10)  # leave >25% headroom


def _vmem_limit_bytes():                         # compiler scoped-VMEM limit
    return int(_vmem_capacity_bytes() * 9 // 10)


# ---------------------------------------------------------------------------
# Pallas kernels
# ---------------------------------------------------------------------------
def _conv3_kernel(*args, n_in, relu):
    """Fused 3x3 "SAME" conv (+bias, +optional ReLU) on one (batch, Cout tile).

    refs = (x_0..x_{n-1}, w_0..w_{n-1}, bias, out, xw_0..xw_{n-1})
      x_i  : (H, W, Ci)       bf16  unpadded NHWC block
      w_i  : (3, 3*Ci, tn)    bf16  kw-folded weights  w[kh, kw*Ci + ci, co]
      bias : (1, tn)          f32
      out  : (H, W, tn)
      xw_i : (H+2, Wo, 3*Ci)  bf16  VMEM scratch: zero halo + kw-shifted copies
    """
    x_refs = args[:n_in]
    w_refs = args[n_in:2 * n_in]
    b_ref = args[2 * n_in]
    o_ref = args[2 * n_in + 1]
    xw_refs = args[2 * n_in + 2:]

    H, W, Co = o_ref.shape
    Wo = xw_refs[0].shape[1]

    acc = None
    for x_ref, w_ref, xw_ref in zip(x_refs, w_refs, xw_refs):
        ci = x_ref.shape[-1]
        x = x_ref[...]                                         # (H, W, ci)
        # In-kernel halo + kw folding:
        #   xw[h, j, kw*ci + c] = x_padded[h, j + kw, c]
        # built with one zero fill and three shifted interior copies.
        xw_ref[...] = jnp.zeros_like(xw_ref)
        xw_ref[1:H + 1, 0:W, ci:2 * ci] = x                    # kw = 1 (center)
        if W > 1:
            xw_ref[1:H + 1, 1:W, 0:ci] = x[:, :W - 1, :]       # kw = 0
            xw_ref[1:H + 1, 0:W - 1, 2 * ci:3 * ci] = x[:, 1:, :]   # kw = 2
        # kh taps: three (H*Wo, 3*ci) x (3*ci, tn) MXU contractions, local acc.
        for kh in range(3):
            patch = xw_ref[kh:kh + H, :, :].reshape(H * Wo, 3 * ci)
            d = jnp.dot(patch, w_ref[kh], preferred_element_type=jnp.float32)
            acc = d if acc is None else acc + d

    out = acc + b_ref[...]
    if relu:
        out = jnp.maximum(out, 0.0)
    out = out.reshape(H, Wo, Co)[:, :W, :]
    o_ref[...] = out.astype(o_ref.dtype)


def _conv1_kernel(*args, n_in, relu):
    """Pointwise (1x1) conv as a matmul.  refs = (x_0.., w_0.., bias, out)."""
    x_refs = args[:n_in]
    w_refs = args[n_in:2 * n_in]
    b_ref = args[2 * n_in]
    o_ref = args[2 * n_in + 1]

    acc = None
    for x_ref, w_ref in zip(x_refs, w_refs):
        d = jnp.dot(x_ref[...], w_ref[...], preferred_element_type=jnp.float32)
        acc = d if acc is None else acc + d
    out = acc + b_ref[...]
    if relu:
        out = jnp.maximum(out, 0.0)
    o_ref[...] = out.astype(o_ref.dtype)


# ---------------------------------------------------------------------------
# Tile selection + XLA fallback (robustness for planes that do not fit VMEM)
# ---------------------------------------------------------------------------
def _pick_tn(cout, fits):
    # tiles are either the full Cout or a multiple of 128 (lane-dense stores)
    cands = sorted({c for c in (1024, 512, 256, 128)
                    if c < cout and cout % c == 0} | {cout}, reverse=True)
    for tn in cands:
        if fits(tn):
            return tn
    return None


def _xla_conv(xs, ws, bias, *, relu, out_dtype):
    # TODO(synk): replace with an H-tiled (1-row halo) Pallas kernel; this
    # fallback only triggers when a full spatial plane cannot fit in VMEM.
    x = xs[0] if len(xs) == 1 else jnp.concatenate(xs, axis=-1)
    w = ws[0] if len(ws) == 1 else jnp.concatenate(ws, axis=2)
    y = jax.lax.conv_general_dilated(
        x.astype(jnp.bfloat16), w.astype(jnp.bfloat16), (1, 1), "SAME",
        dimension_numbers=("NHWC", "HWIO", "NHWC"),
        preferred_element_type=jnp.float32)
    y = y + bias.astype(jnp.float32).reshape(1, 1, 1, -1)
    if relu:
        y = jnp.maximum(y, 0.0)
    return y.astype(out_dtype)


# ---------------------------------------------------------------------------
# Wrappers
#   xs : list of (N, H, W, Ci) activations (conceptually channel-concatenated)
#   ws : matching list of (K, K, Ci, Cout) HWIO weights
#   bias: (Cout,)
# ---------------------------------------------------------------------------
def _conv3(xs, ws, bias, *, relu, out_dtype):
    N, H, W, _ = xs[0].shape
    Cout = ws[0].shape[-1]
    cis = [x.shape[-1] for x in xs]
    Wo = max(16, ((W + 15) // 16) * 16)          # bf16 sublane-packing friendly
    out_isize = jnp.dtype(out_dtype).itemsize
    budget = _vmem_budget_bytes()

    def fits(tn):
        b = 0
        for ci in cis:
            b += 2 * H * W * ci * 2              # x block, double-buffered
            b += (H + 2) * Wo * 3 * ci * 2       # xw scratch (single buffer)
            b += 2 * 3 * 3 * ci * tn * 2         # folded weights, double-buf
            b += H * Wo * 3 * ci * 2             # one patch value in flight
        b += 2 * H * W * tn * out_isize          # out block, double-buffered
        b += H * Wo * tn * 4                     # f32 accumulator value
        return b <= budget

    tn = _pick_tn(Cout, fits)
    if tn is None:
        return _xla_conv(xs, ws, bias, relu=relu, out_dtype=out_dtype)

    xs = [x if x.dtype == jnp.bfloat16 else x.astype(jnp.bfloat16) for x in xs]
    # Fold the kw taps into the contraction dim: (3,3,Ci,Cout) -> (3, 3*Ci, Cout)
    wfs = [w.astype(jnp.bfloat16).reshape(3, 3 * w.shape[2], Cout) for w in ws]
    b2 = bias.astype(jnp.float32).reshape(1, Cout)

    in_specs = []
    for x in xs:
        in_specs.append(pl.BlockSpec((None, H, W, x.shape[-1]),
                                     lambda b, j: (b, 0, 0, 0)))
    for wf in wfs:
        in_specs.append(pl.BlockSpec((3, wf.shape[1], tn),
                                     lambda b, j: (0, 0, j)))
    in_specs.append(pl.BlockSpec((1, tn), lambda b, j: (0, j)))

    scratch = [pltpu.VMEM((H + 2, Wo, 3 * ci), jnp.bfloat16) for ci in cis]
    kernel = functools.partial(_conv3_kernel, n_in=len(xs), relu=relu)

    return pl.pallas_call(
        kernel,
        out_shape=jax.ShapeDtypeStruct((N, H, W, Cout), out_dtype),
        grid_spec=pltpu.PrefetchScalarGridSpec(
            num_scalar_prefetch=0,
            grid=(N, Cout // tn),
            in_specs=in_specs,
            out_specs=pl.BlockSpec((None, H, W, tn),
                                   lambda b, j: (b, 0, 0, j)),
            scratch_shapes=scratch),
        compiler_params=pltpu.CompilerParams(
            dimension_semantics=("parallel", "parallel"),
            vmem_limit_bytes=_vmem_limit_bytes()),
    )(*xs, *wfs, b2)


def _conv1(xs, ws, bias, *, relu, out_dtype):
    N, H, W, _ = xs[0].shape
    M = H * W
    Cout = ws[0].shape[-1]
    cis = [x.shape[-1] for x in xs]
    out_isize = jnp.dtype(out_dtype).itemsize
    budget = _vmem_budget_bytes()

    def fits(tn):
        b = 0
        for ci in cis:
            b += 2 * M * ci * 2 + 2 * ci * tn * 2
        b += 2 * M * tn * out_isize + M * tn * 4
        return b <= budget

    tn = _pick_tn(Cout, fits)
    if tn is None:
        return _xla_conv(xs, ws, bias, relu=relu, out_dtype=out_dtype)

    # Pointwise conv: flatten spatial (free, contiguous reshape) and matmul.
    xf = [(x if x.dtype == jnp.bfloat16 else x.astype(jnp.bfloat16))
          .reshape(N, M, x.shape[-1]) for x in xs]
    wf = [w.astype(jnp.bfloat16).reshape(w.shape[2], Cout) for w in ws]
    b2 = bias.astype(jnp.float32).reshape(1, Cout)

    in_specs = []
    for x in xf:
        in_specs.append(pl.BlockSpec((None, M, x.shape[-1]),
                                     lambda b, j: (b, 0, 0)))
    for w in wf:
        in_specs.append(pl.BlockSpec((w.shape[0], tn), lambda b, j: (0, j)))
    in_specs.append(pl.BlockSpec((1, tn), lambda b, j: (0, j)))

    kernel = functools.partial(_conv1_kernel, n_in=len(xs), relu=relu)
    out = pl.pallas_call(
        kernel,
        out_shape=jax.ShapeDtypeStruct((N, M, Cout), out_dtype),
        grid_spec=pltpu.PrefetchScalarGridSpec(
            num_scalar_prefetch=0,
            grid=(N, Cout // tn),
            in_specs=in_specs,
            out_specs=pl.BlockSpec((None, M, tn), lambda b, j: (b, 0, j)),
            scratch_shapes=[]),
        compiler_params=pltpu.CompilerParams(
            dimension_semantics=("parallel", "parallel"),
            vmem_limit_bytes=_vmem_limit_bytes()),
    )(*xf, *wf, b2)
    return out.reshape(N, H, W, Cout)


def fused_conv(xs, ws, bias, *, ksize, relu, out_dtype=jnp.bfloat16):
    assert ksize in (1, 3)
    if ksize == 3:
        return _conv3(xs, ws, bias, relu=relu, out_dtype=out_dtype)
    return _conv1(xs, ws, bias, relu=relu, out_dtype=out_dtype)


# ---------------------------------------------------------------------------
# UNet building blocks (all conv compute goes through the Pallas kernels).
# ---------------------------------------------------------------------------
def maxpool2x2(x):
    # TODO(synk): fuse into the epilogue of the preceding conv kernel.
    N, H, W, C = x.shape
    return jnp.max(x.reshape(N, H // 2, 2, W // 2, 2, C), axis=(2, 4))


def conv_transpose2x2(x, wt, bt):
    """ConvTranspose2d(k=2, s=2); wt is (1,1,Cin,4*Cout) with the last axis
    ordered (di, dj, co); bt is the (Cout,) bias."""
    N, H, W, _ = x.shape
    Cout = wt.shape[-1] // 4
    y = fused_conv([x], [wt], jnp.tile(bt, 4), ksize=1, relu=False)
    # TODO(synk): fold this 2x2 pixel shuffle into the kernel out index_map.
    y = y.reshape(N, H, W, 2, 2, Cout)
    y = jnp.transpose(y, (0, 1, 3, 2, 4, 5)).reshape(N, 2 * H, 2 * W, Cout)
    return y


def _double_conv(xs, w1s, b1, w2, b2):
    h = fused_conv(xs, w1s, b1, ksize=3, relu=True)
    return fused_conv([h], [w2], b2, ksize=3, relu=True)


def down_layer(x, prm):
    d = _double_conv([x], [prm["w1"]], prm["b1"], prm["w2"], prm["b2"])
    return d, maxpool2x2(d)


def up_layer(x, skip, prm):
    u = conv_transpose2x2(x, prm["wt"], prm["bt"])
    # concat([skip, up]) is folded into the conv as two operands + pre-split
    # weights, so the widest activation never round-trips HBM.
    return _double_conv([skip, u], [prm["w1a"], prm["w1b"]],
                        prm["b1"], prm["w2"], prm["b2"])


def conv1x1_out(x, w, b):
    # Final 1x1 conv; Cout stays unpadded (tiny masked stores beat a 32x
    # inflated writeback/accumulator).
    return fused_conv([x], [w], b, ksize=1, relu=False, out_dtype=jnp.float32)


def unet_forward(params, x_nchw):
    x = jnp.transpose(x_nchw, (0, 2, 3, 1)).astype(jnp.bfloat16)  # NCHW->NHWC
    d1, p1 = down_layer(x, params["down1"])
    d2, p2 = down_layer(p1, params["down2"])
    d3, p3 = down_layer(p2, params["down3"])
    d4, p4 = down_layer(p3, params["down4"])
    bp = params["bottleneck"]
    bottle = _double_conv([p4], [bp["w1"]], bp["b1"], bp["w2"], bp["b2"])
    u1 = up_layer(bottle, d4, params["up1"])
    u2 = up_layer(u1, d3, params["up2"])
    u3 = up_layer(u2, d2, params["up3"])
    u4 = up_layer(u3, d1, params["up4"])
    out = conv1x1_out(u4, params["out"]["w"], params["out"]["b"])
    # forward() returns self.out(up4) with NO sigmoid applied.
    return jnp.transpose(out, (0, 3, 1, 2))                       # back to NCHW


# ---------------------------------------------------------------------------
# Parameters (deterministic He-style init; weights stored bf16 in HWIO layout,
# biases f32).  TODO(synk): PyTorch default init / weight import (ConvTranspose
# weights are (Cin,Cout,kH,kW) in torch) not replicated here.
# ---------------------------------------------------------------------------
def _he_conv(key, k, cin, cout):
    std = (2.0 / (cin * k * k)) ** 0.5
    w = jax.random.normal(key, (k, k, cin, cout), jnp.float32) * std
    return w.astype(jnp.bfloat16)


def init_unet_params(key, in_channels):
    keys = iter(jax.random.split(key, 32))

    def dc(cin, cout):
        return {"w1": _he_conv(next(keys), 3, cin, cout),
                "b1": jnp.zeros((cout,), jnp.float32),
                "w2": _he_conv(next(keys), 3, cout, cout),
                "b2": jnp.zeros((cout,), jnp.float32)}

    def up(cin, cout):
        std = (2.0 / (cin * 4)) ** 0.5
        wt = (jax.random.normal(next(keys), (1, 1, cin, 4 * cout),
                                jnp.float32) * std).astype(jnp.bfloat16)
        return {"wt": wt,
                "bt": jnp.zeros((cout,), jnp.float32),
                # first conv of the double conv takes concat([skip, up]);
                # weight stored pre-split so the concat never materializes.
                "w1a": _he_conv(next(keys), 3, cout, cout),   # skip half
                "w1b": _he_conv(next(keys), 3, cout, cout),   # upsampled half
                "b1": jnp.zeros((cout,), jnp.float32),
                "w2": _he_conv(next(keys), 3, cout, cout),
                "b2": jnp.zeros((cout,), jnp.float32)}

    return {"down1": dc(in_channels, 64),
            "down2": dc(64, 128),
            "down3": dc(128, 256),
            "down4": dc(256, 512),
            "bottleneck": dc(512, 1024),
            "up1": up(1024, 512),
            "up2": up(512, 256),
            "up3": up(256, 128),
            "up4": up(128, 64),
            "out": {"w": _he_conv(next(keys), 1, 64, in_channels),
                    "b": jnp.zeros((in_channels,), jnp.float32)}}


# ---------------------------------------------------------------------------
if __name__ == "__main__":
    key = jax.random.PRNGKey(0)
    kx, kp, k1, k2, k3, k4, k5 = jax.random.split(key, 7)

    # --- sanity check: fused 3x3 conv vs an XLA reference -------------------
    # (inputs pre-rounded to bf16 so only the accumulation differs)
    def conv_ref(x, w, b, relu):
        x32 = x.astype(jnp.bfloat16).astype(jnp.float32)
        w32 = w.astype(jnp.bfloat16).astype(jnp.float32)
        y = jax.lax.conv_general_dilated(
            x32, w32, (1, 1), "SAME",
            dimension_numbers=("NHWC", "HWIO", "NHWC"),
            precision=jax.lax.Precision.HIGHEST) + b
        return jnp.maximum(y, 0.0) if relu else y

    xa = jax.random.normal(k1, (2, 16, 16, 8), jnp.float32)
    wa = jax.random.normal(k2, (3, 3, 8, 64), jnp.float32) * 0.2
    ba = jax.random.normal(k3, (64,), jnp.float32)
    got = fused_conv([xa], [wa], ba, ksize=3, relu=True, out_dtype=jnp.float32)
    assert bool(jnp.allclose(got, conv_ref(xa, wa, ba, True),
                             atol=3e-2, rtol=3e-2))

    # two-operand (implicit channel concat) path at a non-multiple-of-16 width
    xb0 = jax.random.normal(k4, (2, 4, 4, 16), jnp.float32)
    xb1 = jax.random.normal(k5, (2, 4, 4, 16), jnp.float32)
    wb = jax.random.normal(k2, (3, 3, 32, 32), jnp.float32) * 0.2
    bb = jnp.zeros((32,), jnp.float32)
    got2 = fused_conv([xb0, xb1], [wb[:, :, :16, :], wb[:, :, 16:, :]], bb,
                      ksize=3, relu=False, out_dtype=jnp.float32)
    ref2 = conv_ref(jnp.concatenate([xb0, xb1], axis=-1), wb, bb, False)
    assert bool(jnp.allclose(got2, ref2, atol=3e-2, rtol=3e-2))

    # transposed conv (1x1 conv + pixel shuffle) vs an explicit reference
    ci_t, co_t = 8, 4
    xt = jax.random.normal(k4, (2, 4, 4, ci_t), jnp.float32)
    w4 = jax.random.normal(k5, (2, 2, ci_t, co_t), jnp.float32) * 0.3
    bt = jax.random.normal(k3, (co_t,), jnp.float32)
    wt = jnp.transpose(w4, (2, 0, 1, 3)).reshape(1, 1, ci_t, 4 * co_t)
    got_t = conv_transpose2x2(xt.astype(jnp.bfloat16), wt, bt)
    got_t = got_t.astype(jnp.float32)
    xt_r = xt.astype(jnp.bfloat16).astype(jnp.float32)
    w4_r = w4.astype(jnp.bfloat16).astype(jnp.float32)
    ref_t = jnp.einsum("nhwc,ijco->nhiwjo", xt_r, w4_r).reshape(2, 8, 8, co_t)
    ref_t = ref_t + bt
    assert bool(jnp.allclose(got_t, ref_t, atol=3e-2, rtol=3e-2))

    # --- end-to-end UNet forward --------------------------------------------
    B, C, H, W = 2, 4, 16, 16
    x = jax.random.normal(kx, (B, C, H, W), jnp.float32)
    params = init_unet_params(kp, in_channels=C)

    out = jax.jit(unet_forward)(params, x)
    out = jax.block_until_ready(out)

    assert out.shape == (B, C, H, W), out.shape
    assert bool(jnp.all(jnp.isfinite(out)))
    print("KERNEL_OK")
</pallas_src>

<mosaic_0001>
module attributes {stable_mosaic.version = 11 : i64} {
  func.func @_conv3_kernel(%arg0: i32, %arg1: i32, %arg2: memref<1x16x16x8xbf16, #tpu.memory_space<vmem>>, %arg3: memref<3x24x64xbf16, #tpu.memory_space<vmem>>, %arg4: memref<1x64xf32, #tpu.memory_space<vmem>>, %arg5: memref<1x16x16x64xf32, #tpu.memory_space<vmem>>, %arg6: memref<18x16x24xbf16, #tpu.memory_space<vmem>>) attributes {dimension_semantics = [#tpu.dimension_semantics<parallel>, #tpu.dimension_semantics<parallel>], iteration_bounds = array<i64: 2, 1>, scalar_prefetch = 0 : i64, scratch_operands = 1 : i64, tpu.core_type = #tpu.core_type<tc>, window_params = [{transform_indices = @transform_0, window_bounds = array<i64: 1, 16, 16, 8>}, {transform_indices = @transform_1, window_bounds = array<i64: 3, 24, 64>}, {transform_indices = @transform_2, window_bounds = array<i64: 1, 64>}, {transform_indices = @transform_3, window_bounds = array<i64: 1, 16, 16, 64>}]} {
    %c0 = arith.constant 0 : index
    %c0_0 = arith.constant 0 : index
    %c0_1 = arith.constant 0 : index
    %c0_2 = arith.constant 0 : index
    %0 = vector.load %arg2[%c0, %c0_0, %c0_1, %c0_2] : memref<1x16x16x8xbf16, #tpu.memory_space<vmem>>, vector<1x16x16x8xbf16>
    %1 = vector.shape_cast %0 : vector<1x16x16x8xbf16> to vector<16x16x8xbf16>
    %cst = arith.constant 0.000000e+00 : bf16
    %2 = vector.broadcast %cst : bf16 to vector<18x16x24xbf16>
    %c0_3 = arith.constant 0 : index
    %c0_4 = arith.constant 0 : index
    %c0_5 = arith.constant 0 : index
    %3 = vector.load %arg6[%c0_3, %c0_4, %c0_5] : memref<18x16x24xbf16, #tpu.memory_space<vmem>>, vector<18x16x24xbf16>
    tpu.vector_store %arg6[%c0_3, %c0_4, %c0_5], %2 {strides = array<i32>} : memref<18x16x24xbf16, #tpu.memory_space<vmem>>, vector<18x16x24xbf16>,
    %c1 = arith.constant 1 : index
    %c0_6 = arith.constant 0 : index
    %c8 = arith.constant 8 : index
    %4 = vector.load %arg6[%c1, %c0_6, %c8] : memref<18x16x24xbf16, #tpu.memory_space<vmem>>, vector<16x16x8xbf16>
    tpu.vector_store %arg6[%c1, %c0_6, %c8], %1 {strides = array<i32>} : memref<18x16x24xbf16, #tpu.memory_space<vmem>>, vector<16x16x8xbf16>,
    %5 = vector.extract_strided_slice %1 {offsets = [0, 0, 0], sizes = [16, 15, 8], strides = [1, 1, 1]} : vector<16x16x8xbf16> to vector<16x15x8xbf16>
    %c1_7 = arith.constant 1 : index
    %c1_8 = arith.constant 1 : index
    %c0_9 = arith.constant 0 : index
    %6 = vector.load %arg6[%c1_7, %c1_8, %c0_9] : memref<18x16x24xbf16, #tpu.memory_space<vmem>>, vector<16x15x8xbf16>
    tpu.vector_store %arg6[%c1_7, %c1_8, %c0_9], %5 {strides = array<i32>} : memref<18x16x24xbf16, #tpu.memory_space<vmem>>, vector<16x15x8xbf16>,
    %7 = vector.extract_strided_slice %1 {offsets = [0, 1, 0], sizes = [16, 15, 8], strides = [1, 1, 1]} : vector<16x16x8xbf16> to vector<16x15x8xbf16>
    %c1_10 = arith.constant 1 : index
    %c0_11 = arith.constant 0 : index
    %c16 = arith.constant 16 : index
    %8 = vector.load %arg6[%c1_10, %c0_11, %c16] : memref<18x16x24xbf16, #tpu.memory_space<vmem>>, vector<16x15x8xbf16>
    tpu.vector_store %arg6[%c1_10, %c0_11, %c16], %7 {strides = array<i32>} : memref<18x16x24xbf16, #tpu.memory_space<vmem>>, vector<16x15x8xbf16>,
    %c0_12 = arith.constant 0 : index
    %c0_13 = arith.constant 0 : index
    %c0_14 = arith.constant 0 : index
    %9 = vector.load %arg6[%c0_12, %c0_13, %c0_14] : memref<18x16x24xbf16, #tpu.memory_space<vmem>>, vector<16x16x24xbf16>
    %10 = vector.shape_cast %9 : vector<16x16x24xbf16> to vector<256x24xbf16>
    %c0_15 = arith.constant 0 : index
    %c0_16 = arith.constant 0 : index
    %c0_17 = arith.constant 0 : index
    %11 = vector.load %arg3[%c0_15, %c0_16, %c0_17] : memref<3x24x64xbf16, #tpu.memory_space<vmem>>, vector<1x24x64xbf16>
    %12 = vector.shape_cast %11 : vector<1x24x64xbf16> to vector<24x64xbf16>
    %cst_18 = arith.constant dense<0.000000e+00> : vector<256x64xf32>
    %13 = tpu.matmul %10, %12, %cst_18 {dimension_numbers = #tpu.dot_dimension_numbers<[1], [0], [0], [1], [0, 0, 1, 1], [], []>} : vector<256x24xbf16>, vector<24x64xbf16>, vector<256x64xf32> -> vector<256x64xf32>
    %c1_19 = arith.constant 1 : index
    %c0_20 = arith.constant 0 : index
    %c0_21 = arith.constant 0 : index
    %14 = vector.load %arg6[%c1_19, %c0_20, %c0_21] : memref<18x16x24xbf16, #tpu.memory_space<vmem>>, vector<16x16x24xbf16>
    %15 = vector.shape_cast %14 : vector<16x16x24xbf16> to vector<256x24xbf16>
    %c1_22 = arith.constant 1 : index
    %c0_23 = arith.constant 0 : index
    %c0_24 = arith.constant 0 : index
    %16 = vector.load %arg3[%c1_22, %c0_23, %c0_24] : memref<3x24x64xbf16, #tpu.memory_space<vmem>>, vector<1x24x64xbf16>
    %17 = vector.shape_cast %16 : vector<1x24x64xbf16> to vector<24x64xbf16>
    %cst_25 = arith.constant dense<0.000000e+00> : vector<256x64xf32>
    %18 = tpu.matmul %15, %17, %cst_25 {dimension_numbers = #tpu.dot_dimension_numbers<[1], [0], [0], [1], [0, 0, 1, 1], [], []>} : vector<256x24xbf16>, vector<24x64xbf16>, vector<256x64xf32> -> vector<256x64xf32>
    %19 = arith.addf %13, %18 : vector<256x64xf32>
    %c2 = arith.constant 2 : index
    %c0_26 = arith.constant 0 : index
    %c0_27 = arith.constant 0 : index
    %20 = vector.load %arg6[%c2, %c0_26, %c0_27] : memref<18x16x24xbf16, #tpu.memory_space<vmem>>, vector<16x16x24xbf16>
    %21 = vector.shape_cast %20 : vector<16x16x24xbf16> to vector<256x24xbf16>
    %c2_28 = arith.constant 2 : index
    %c0_29 = arith.constant 0 : index
    %c0_30 = arith.constant 0 : index
    %22 = vector.load %arg3[%c2_28, %c0_29, %c0_30] : memref<3x24x64xbf16, #tpu.memory_space<vmem>>, vector<1x24x64xbf16>
    %23 = vector.shape_cast %22 : vector<1x24x64xbf16> to vector<24x64xbf16>
    %cst_31 = arith.constant dense<0.000000e+00> : vector<256x64xf32>
    %24 = tpu.matmul %21, %23, %cst_31 {dimension_numbers = #tpu.dot_dimension_numbers<[1], [0], [0], [1], [0, 0, 1, 1], [], []>} : vector<256x24xbf16>, vector<24x64xbf16>, vector<256x64xf32> -> vector<256x64xf32>
    %25 = arith.addf %19, %24 : vector<256x64xf32>
    %c0_32 = arith.constant 0 : index
    %c0_33 = arith.constant 0 : index
    %26 = vector.load %arg4[%c0_32, %c0_33] : memref<1x64xf32, #tpu.memory_space<vmem>>, vector<1x64xf32>
    %27 = vector.broadcast %26 : vector<1x64xf32> to vector<256x64xf32>
    %28 = arith.addf %25, %27 : vector<256x64xf32>
    %cst_34 = arith.constant 0.000000e+00 : f32
    %29 = vector.broadcast %cst_34 : f32 to vector<256x64xf32>
    %30 = arith.maximumf %28, %29 : vector<256x64xf32>
    %31 = vector.shape_cast %30 : vector<256x64xf32> to vector<16x16x64xf32>
    %c0_35 = arith.constant 0 : index
    %c0_36 = arith.constant 0 : index
    %c0_37 = arith.constant 0 : index
    %c0_38 = arith.constant 0 : index
    %32 = vector.load %arg5[%c0_35, %c0_36, %c0_37, %c0_38] : memref<1x16x16x64xf32, #tpu.memory_space<vmem>>, vector<1x16x16x64xf32>
    %33 = vector.shape_cast %32 : vector<1x16x16x64xf32> to vector<16x16x64xf32>
    %34 = vector.shape_cast %31 : vector<16x16x64xf32> to vector<1x16x16x64xf32>
    tpu.vector_store %arg5[%c0_35, %c0_36, %c0_37, %c0_38], %34 {strides = array<i32>} : memref<1x16x16x64xf32, #tpu.memory_space<vmem>>, vector<1x16x16x64xf32>,
    return
  }
  func.func @transform_0(%arg0: i32, %arg1: i32) -> (i32, i32, i32, i32) {
    %c0_i32 = arith.constant 0 : i32
    %c0_i32_0 = arith.constant 0 : i32
    %c0_i32_1 = arith.constant 0 : i32
    %c0_i32_2 = arith.constant 0 : i32
    return %arg0, %c0_i32, %c0_i32_0, %c0_i32_1 : i32, i32, i32, i32
  }
  func.func @transform_1(%arg0: i32, %arg1: i32) -> (i32, i32, i32) {
    %c0_i32 = arith.constant 0 : i32
    %c0_i32_0 = arith.constant 0 : i32
    %c0_i32_1 = arith.constant 0 : i32
    return %c0_i32, %c0_i32_0, %arg1 : i32, i32, i32
  }
  func.func @transform_2(%arg0: i32, %arg1: i32) -> (i32, i32) {
    %c0_i32 = arith.constant 0 : i32
    %c0_i32_0 = arith.constant 0 : i32
    return %c0_i32, %arg1 : i32, i32
  }
  func.func @transform_3(%arg0: i32, %arg1: i32) -> (i32, i32, i32, i32) {
    %c0_i32 = arith.constant 0 : i32
    %c0_i32_0 = arith.constant 0 : i32
    %c0_i32_1 = arith.constant 0 : i32
    return %arg0, %c0_i32, %c0_i32_0, %arg1 : i32, i32, i32, i32
  }
}

</mosaic_0001>

<llo_original>
// kernel: tpu_custom_call.1
$region0: #{tpu_custom_call.1}
  #allocation0 [shape = 'u32[]', space=smem, size = 0x4, offset = 0x4, fixed_abs, tag = 'smem constant byte address 0x4 - core index']
  #allocation1 [shape = 'u32[144,128]{1,0:T(1,128)}', space=vmem, size = 0x12000, scoped, tag = 'internal scratch']
  #allocation2 [shape = 'bf16[18,16,24]{2,1,0:T(16,128)(2,1)}', space=vmem, size = 0x12000, scoped, tag = 'scratch operand']
  %s0 = inlined_call_operand.vmem [shape: bf16[2,16,16,8], index: 0, kind: input, shape index: {}]
  %s1 = inlined_call_operand.vmem [shape: bf16[3,24,64], index: 1, kind: input, shape index: {}]
  %s2 = inlined_call_operand.vmem [shape: f32[1,64], index: 2, kind: input, shape index: {}]
  %s3 = inlined_call_operand.hbm [shape: f32[2,16,16,64], index: 3, kind: output, shape index: {}]
  %s4 = sld [smem:[#allocation0]]
  $region45: #{tpu_custom_call.1} parent=0
    _
  %s6 = ssub.s32 1, %s4
  %s7 = scalar_select 0, %s6, %s4
  $region1: #{tpu_custom_call.1} parent=0
    #allocation3 [shape = 'u8[262144]{0}', space=vmem, size = 0x40000, scoped, tag = 'output window, operand 0']
    #allocation4 [shape = 's32[2]{0}', space=sflag, size = 0x8, scoped, tag = 'scoped memory for tpu_custom_call.1']
    %8 = vsyncpa [#allocation4], 0
    %s9 = scalar_lea.sflag [#allocation4], 1
    %10 = vsyncpa %s9, 0
    loop: start=0, step=1, limit=4
    $region2: #{tpu_custom_call.1} parent=1 // loop_pre_header
      _
    $region3: #{tpu_custom_call.1} parent=1 // loop_header
      %s12 = sphi 0, %s16
      %p13 = scmp.ge.s32.totalorder %s12, 4
      %s19 = sphi 0, %s31
      %s20 = sphi 0, %s27
      %s21 = sphi 0, %s19
      %s22 = sphi 0, %s20
      %s23 = sphi 0, %s21
      %s24 = sphi 0, %s22
      %s34 = sphi 0, %s36
      %s37 = sphi 0, %s34
      %s38 = sphi 0, %s37
      %s54 = sphi 0, %s38
      %s60 = sphi 0, %s62
      %s63 = sphi 0, %s60
      %s64 = sphi 0, %s63
      %s80 = sphi 0, %s64
      %s86 = sphi 0, %s88
      %s89 = sphi 0, %s86
      %s90 = sphi 0, %s89
      %s106 = sphi 0, %s90
      %s114 = sphi 0, %s116
      %s117 = sphi 0, %s114
      %s118 = sphi 0, %s117
      %s134 = sphi 0, %s118
    $region4: #{tpu_custom_call.1} parent=1 // loop_header_branch
      %15 = sbr.rel (%p13) target = $region8
    $region5: #{tpu_custom_call.1} parent=1 // loop_body
      %s17 = ssub.s32 %s12, 1
      %s18 = ssub.s32 %s12, 2
      %s25 = sadd.s32 1, %s20
      %p26 = scmp.ge.s32.totalorder %s25, 1
      %s27 = scalar_select %p26, 0, %s25
      %s28 = sadd.s32 1, %s19
      %s29 = scalar_select %p26, %s28, %s19
      %p30 = scmp.ge.s32.totalorder %s29, 2
      %s31 = scalar_select %p30, 0, %s29
      %s32 = ssub.s32 %s19, %s31
      %p33 = scmp.eq.s32.totalorder %s32, 0
      %s35 = sadd.s32 %s34, 1
      %s36 = scalar_select %p33, %s34, %s35
      %p39 = pneg %p33
      %p40 = scmp.eq.s32.totalorder %s12, 1
      %p41 = por %p39, %p40
      %p42 = scmp.ne.s32.totalorder %s34, %s37
      %p43 = scmp.eq.s32.totalorder %s12, 0
      %p44 = por %p42, %p43
      %p45 = scmp.ne.s32.totalorder %s34, %s37
      %p46 = scmp.eq.s32.totalorder %s17, 1
      %p47 = por %p45, %p46
      %p48 = scmp.ne.s32.totalorder %s37, %s38
      %p49 = scmp.eq.s32.totalorder %s17, 0
      %p50 = por %p48, %p49
      %p51 = scmp.ne.s32.totalorder %s37, %s38
      %p52 = scmp.eq.s32.totalorder %s18, 1
      %p53 = por %p51, %p52
      %p55 = scmp.ne.s32.totalorder %s38, %s54
      %p56 = scmp.eq.s32.totalorder %s18, 0
      %p57 = por %p55, %p56
      %s58 = ssub.s32 %s20, %s27
      %p59 = scmp.eq.s32.totalorder %s58, 0
      %s61 = sadd.s32 %s60, 1
      %s62 = scalar_select %p59, %s60, %s61
      %p65 = pneg %p59
      %p66 = scmp.eq.s32.totalorder %s12, 1
      %p67 = por %p65, %p66
      %p68 = scmp.ne.s32.totalorder %s60, %s63
      %p69 = scmp.eq.s32.totalorder %s12, 0
      %p70 = por %p68, %p69
      %p71 = scmp.ne.s32.totalorder %s60, %s63
      %p72 = scmp.eq.s32.totalorder %s17, 1
      %p73 = por %p71, %p72
      %p74 = scmp.ne.s32.totalorder %s63, %s64
      %p75 = scmp.eq.s32.totalorder %s17, 0
      %p76 = por %p74, %p75
      %p77 = scmp.ne.s32.totalorder %s63, %s64
      %p78 = scmp.eq.s32.totalorder %s18, 1
      %p79 = por %p77, %p78
      %p81 = scmp.ne.s32.totalorder %s64, %s80
      %p82 = scmp.eq.s32.totalorder %s18, 0
      %p83 = por %p81, %p82
      %s84 = ssub.s32 %s20, %s27
      %p85 = scmp.eq.s32.totalorder %s84, 0
      %s87 = sadd.s32 %s86, 1
      %s88 = scalar_select %p85, %s86, %s87
      %p91 = pneg %p85
      %p92 = scmp.eq.s32.totalorder %s12, 1
      %p93 = por %p91, %p92
      %p94 = scmp.ne.s32.totalorder %s86, %s89
      %p95 = scmp.eq.s32.totalorder %s12, 0
      %p96 = por %p94, %p95
      %p97 = scmp.ne.s32.totalorder %s86, %s89
      %p98 = scmp.eq.s32.totalorder %s17, 1
      %p99 = por %p97, %p98
      %p100 = scmp.ne.s32.totalorder %s89, %s90
      %p101 = scmp.eq.s32.totalorder %s17, 0
      %p102 = por %p100, %p101
      %p103 = scmp.ne.s32.totalorder %s89, %s90
      %p104 = scmp.eq.s32.totalorder %s18, 1
      %p105 = por %p103, %p104
      %p107 = scmp.ne.s32.totalorder %s90, %s106
      %p108 = scmp.eq.s32.totalorder %s18, 0
      %p109 = por %p107, %p108
      %s110 = ssub.s32 %s19, %s31
      %s111 = ssub.s32 %s20, %s27
      %s112 = sor.u32 %s110, %s111
      %p113 = scmp.eq.s32.totalorder %s112, 0
      %s115 = sadd.s32 %s114, 1
      %s116 = scalar_select %p113, %s114, %s115
      %p119 = pneg %p113
      %p120 = scmp.eq.s32.totalorder %s12, 1
      %p121 = por %p119, %p120
      %p122 = scmp.ne.s32.totalorder %s114, %s117
      %p123 = scmp.eq.s32.totalorder %s12, 0
      %p124 = por %p122, %p123
      %p125 = scmp.ne.s32.totalorder %s114, %s117
      %p126 = scmp.eq.s32.totalorder %s17, 1
      %p127 = por %p125, %p126
      %p128 = scmp.ne.s32.totalorder %s117, %s118
      %p129 = scmp.eq.s32.totalorder %s17, 0
      %p130 = por %p128, %p129
      %p131 = scmp.ne.s32.totalorder %s117, %s118
      %p132 = scmp.eq.s32.totalorder %s18, 1
      %p133 = por %p131, %p132
      %p135 = scmp.ne.s32.totalorder %s118, %s134
      %p136 = scmp.eq.s32.totalorder %s18, 0
      %p137 = por %p135, %p136
      %p138 = scmp.le.s32.totalorder 1, %s12
      %p139 = scmp.lt.s32.totalorder %s12, 3
      %p140 = pnand %p138, %p139
      %p141 = pneg %p140
      // Predicated region
      $region9: #{tpu_custom_call.1} parent=5 // pred_check
        _
      $region10: #{tpu_custom_call.1} parent=5 // pred_check_branch
        %143 = sbr.rel (%p140) target = $region12
      $region11: #{tpu_custom_call.1} parent=5 // pred_region
        %s144 = ssub.s32 %s12, 1
        // Predicated region
        $region13: #{tpu_custom_call.1} parent=11 // pred_check
          %p145 = pneg %p76
        $region14: #{tpu_custom_call.1} parent=11 // pred_check_branch
          %147 = sbr.rel (%p145) target = $region16
        $region15: #{tpu_custom_call.1} parent=11 // pred_region
          %p148 = scmp.lt.s32.totalorder %s22, 0
          %s149 = scalar_select %p148, %s22, 0
          %s150 = smul.addr %s149, 4
          %s151 = scalar_lea.vmem %s1, %s150
        $region16: #{tpu_custom_call.1} parent=11 // pred_fallthru
          _
        // Predicated region
        $region17: #{tpu_custom_call.1} parent=11 // pred_check
          %p152 = pneg %p102
        $region18: #{tpu_custom_call.1} parent=11 // pred_check_branch
          %154 = sbr.rel (%p152) target = $region20
        $region19: #{tpu_custom_call.1} parent=11 // pred_region
          %p155 = scmp.lt.s32.totalorder %s22, 0
          %s156 = scalar_select %p155, %s22, 0
          %s157 = scalar_lea.vmem %s2, %s156
        $region20: #{tpu_custom_call.1} parent=11 // pred_fallthru
          _
      $region12: #{tpu_custom_call.1} parent=5 // pred_fallthru
        _
      %p158 = scmp.lt.s32.totalorder %s12, 2
      // Predicated region
      $region21: #{tpu_custom_call.1} parent=5 // pred_check
        %p159 = pneg %p158
      $region22: #{tpu_custom_call.1} parent=5 // pred_check_branch
        %161 = sbr.rel (%p159) target = $region24
      $region23: #{tpu_custom_call.1} parent=5 // pred_region
        // Predicated region
        $region25: #{tpu_custom_call.1} parent=23 // pred_check
          %p162 = pneg %p44
        $region26: #{tpu_custom_call.1} parent=23 // pred_check_branch
          %164 = sbr.rel (%p162) target = $region28
        $region27: #{tpu_custom_call.1} parent=23 // pred_region
          %p165 = scmp.lt.s32.totalorder %s19, 1
          %s166 = scalar_select %p165, %s19, 1
          %s167 = smul.addr %s166, 32
          %s168 = smul.addr %s167, 4
          %s169 = scalar_lea.vmem %s0, %s168
        $region28: #{tpu_custom_call.1} parent=23 // pred_fallthru
          _
      $region24: #{tpu_custom_call.1} parent=5 // pred_fallthru
        _
      %p170 = scmp.le.s32.totalorder 1, %s12
      %p171 = scmp.lt.s32.totalorder %s12, 3
      %p172 = pnand %p170, %p171
      %p173 = pneg %p172
      // Predicated region
      $region29: #{tpu_custom_call.1} parent=5 // pred_check
        _
      $region30: #{tpu_custom_call.1} parent=5 // pred_check_branch
        %175 = sbr.rel (%p172) target = $region32
      $region31: #{tpu_custom_call.1} parent=5 // pred_region
        %s176 = ssub.s32 %s12, 1
        %p177 = scmp.lt.s32.totalorder %s21, 1
        %s178 = scalar_select %p177, %s21, 1
        %s179 = smul.addr %s178, 32
        %s180 = smul.addr %s179, 4
        %s181 = scalar_lea.vmem %s0, %s180
        %p182 = pneg %p50
        %p183 = pneg %p47
        %p184 = scmp.lt.s32.totalorder %s22, 0
        %s185 = scalar_select %p184, %s22, 0
        %s186 = smul.addr %s185, 4
        %s187 = scalar_lea.vmem %s1, %s186
        %p188 = pneg %p76
        %p189 = pneg %p73
        %p190 = scmp.lt.s32.totalorder %s22, 0
        %s191 = scalar_select %p190, %s22, 0
        %s192 = scalar_lea.vmem %s2, %s191
        %p193 = pneg %p102
        %p194 = pneg %p99
        %p195 = pneg %p130
        %p196 = pneg %p127
        %s197 = sand.u32 %s117, 1
        %s198 = scalar_lea.sflag [#allocation4], %s197
        %s199 = sand.u32 %s117, 1
        %s200 = smul.addr %s199, 256
        %s201 = scalar_lea.vmem [#allocation3], %s200
        %p202 = scmp.lt.s32.totalorder %s21, 1
        %s203 = scalar_select %p202, %s21, 1
        %s204 = smul.addr %s203, 32
        %s205 = smul.addr %s204, 4
        %s206 = scalar_lea.vmem %s0, %s205
        %p207 = scmp.lt.s32.totalorder %s22, 0
        %s208 = scalar_select %p207, %s22, 0
        %s209 = smul.addr %s208, 4
        %s210 = scalar_lea.vmem %s1, %s209
        %p211 = scmp.lt.s32.totalorder %s22, 0
        %s212 = scalar_select %p211, %s22, 0
        %s213 = scalar_lea.vmem %s2, %s212
        %v215 = vld [vmem:[%s206] sm:$0xf]
        %v216 = vld [vmem:[%s206 + $0x4] sm:$0xf]
        %v217 = vld [vmem:[%s206 + $0x8] sm:$0xf]
        %v218 = vld [vmem:[%s206 + $0xc] sm:$0xf]
        %v219 = vld [vmem:[%s206 + $0x10] sm:$0xf]
        %v220 = vld [vmem:[%s206 + $0x14] sm:$0xf]
        %v221 = vld [vmem:[%s206 + $0x18] sm:$0xf]
        %v222 = vld [vmem:[%s206 + $0x1c] sm:$0xf]
        %v223 = vld [vmem:[%s206 + $0x20] sm:$0xf]
        %v224 = vld [vmem:[%s206 + $0x24] sm:$0xf]
        %v225 = vld [vmem:[%s206 + $0x28] sm:$0xf]
        %v226 = vld [vmem:[%s206 + $0x2c] sm:$0xf]
        %v227 = vld [vmem:[%s206 + $0x30] sm:$0xf]
        %v228 = vld [vmem:[%s206 + $0x34] sm:$0xf]
        %v229 = vld [vmem:[%s206 + $0x38] sm:$0xf]
        %v230 = vld [vmem:[%s206 + $0x3c] sm:$0xf]
        %v231 = vld [vmem:[%s206 + $0x40] sm:$0xf]
        %v232 = vld [vmem:[%s206 + $0x44] sm:$0xf]
        %v233 = vld [vmem:[%s206 + $0x48] sm:$0xf]
        %v234 = vld [vmem:[%s206 + $0x4c] sm:$0xf]
        %v235 = vld [vmem:[%s206 + $0x50] sm:$0xf]
        %v236 = vld [vmem:[%s206 + $0x54] sm:$0xf]
        %v237 = vld [vmem:[%s206 + $0x58] sm:$0xf]
        %v238 = vld [vmem:[%s206 + $0x5c] sm:$0xf]
        %v239 = vld [vmem:[%s206 + $0x60] sm:$0xf]
        %v240 = vld [vmem:[%s206 + $0x64] sm:$0xf]
        %v241 = vld [vmem:[%s206 + $0x68] sm:$0xf]
        %v242 = vld [vmem:[%s206 + $0x6c] sm:$0xf]
        %v243 = vld [vmem:[%s206 + $0x70] sm:$0xf]
        %v244 = vld [vmem:[%s206 + $0x74] sm:$0xf]
        %v245 = vld [vmem:[%s206 + $0x78] sm:$0xf]
        %v246 = vld [vmem:[%s206 + $0x7c] sm:$0xf]
        %vm247 = vcmask 195584
        %248 = vst.msk [vmem:[#allocation2] sm:$0xff] %vm247, 0
        %249 = vst.msk [vmem:[#allocation2 + $0x8] sm:$0xff] %vm247, 0
        %250 = vst.msk [vmem:[#allocation2 + $0x10] sm:$0xff] %vm247, 0
        %251 = vst.msk [vmem:[#allocation2 + $0x18] sm:$0xff] %vm247, 0
        %252 = vst.msk [vmem:[#allocation2 + $0x20] sm:$0xff] %vm247, 0
        %253 = vst.msk [vmem:[#allocation2 + $0x28] sm:$0xff] %vm247, 0
        %254 = vst.msk [vmem:[#allocation2 + $0x30] sm:$0xff] %vm247, 0
        %255 = vst.msk [vmem:[#allocation2 + $0x38] sm:$0xff] %vm247, 0
        %256 = vst.msk [vmem:[#allocation2 + $0x40] sm:$0xff] %vm247, 0
        %257 = vst.msk [vmem:[#allocation2 + $0x48] sm:$0xff] %vm247, 0
        %258 = vst.msk [vmem:[#allocation2 + $0x50] sm:$0xff] %vm247, 0
        %259 = vst.msk [vmem:[#allocation2 + $0x58] sm:$0xff] %vm247, 0
        %260 = vst.msk [vmem:[#allocation2 + $0x60] sm:$0xff] %vm247, 0
        %261 = vst.msk [vmem:[#allocation2 + $0x68] sm:$0xff] %vm247, 0
        %262 = vst.msk [vmem:[#allocation2 + $0x70] sm:$0xff] %vm247, 0
        %263 = vst.msk [vmem:[#allocation2 + $0x78] sm:$0xff] %vm247, 0
        %264 = vst.msk [vmem:[#allocation2 + $0x80] sm:$0xff] %vm247, 0
        %265 = vst.msk [vmem:[#allocation2 + $0x88] sm:$0xff] %vm247, 0
        %v298 = vunpack.c.l.b16 %v215
        %v299 = vunpack.c.l.b16 %v216
        %v300 = vunpack.c.l.b16 %v217
        %v301 = vunpack.c.l.b16 %v218
        %v302 = vunpack.c.l.b16 %v219
        %v303 = vunpack.c.l.b16 %v220
        %v304 = vunpack.c.l.b16 %v221
        %v305 = vunpack.c.l.b16 %v222
        %v306 = vunpack.c.l.b16 %v223
        %v307 = vunpack.c.l.b16 %v224
        %v308 = vunpack.c.l.b16 %v225
        %v309 = vunpack.c.l.b16 %v226
        %v310 = vunpack.c.l.b16 %v227
        %v311 = vunpack.c.l.b16 %v228
        %v312 = vunpack.c.l.b16 %v229
        %v313 = vunpack.c.l.b16 %v230
        %v314 = vunpack.c.l.b16 %v231
        %v315 = vunpack.c.l.b16 %v232
        %v316 = vunpack.c.l.b16 %v233
        %v317 = vunpack.c.l.b16 %v234
        %v318 = vunpack.c.l.b16 %v235
        %v319 = vunpack.c.l.b16 %v236
        %v320 = vunpack.c.l.b16 %v237
        %v321 = vunpack.c.l.b16 %v238
        %v322 = vunpack.c.l.b16 %v239
        %v323 = vunpack.c.l.b16 %v240
        %v324 = vunpack.c.l.b16 %v241
        %v325 = vunpack.c.l.b16 %v242
        %v326 = vunpack.c.l.b16 %v243
        %v327 = vunpack.c.l.b16 %v244
        %v328 = vunpack.c.l.b16 %v245
        %v329 = vunpack.c.l.b16 %v246
        %v330 = vpack.c.b16 %v299, %v298
        %v331 = vpack.c.b16 %v301, %v300
        %v332 = vpack.c.b16 %v303, %v302
        %v333 = vpack.c.b16 %v305, %v304
        %v334 = vpack.c.b16 %v307, %v306
        %v335 = vpack.c.b16 %v309, %v308
        %v336 = vpack.c.b16 %v311, %v310
        %v337 = vpack.c.b16 %v313, %v312
        %v338 = vpack.c.b16 %v315, %v314
        %v339 = vpack.c.b16 %v317, %v316
        %v340 = vpack.c.b16 %v319, %v318
        %v341 = vpack.c.b16 %v321, %v320
        %v342 = vpack.c.b16 %v323, %v322
        %v343 = vpack.c.b16 %v325, %v324
        %v344 = vpack.c.b16 %v327, %v326
        %v345 = vpack.c.b16 %v329, %v328
        %346 = vrot.lane.b32.xlu0 %v330, 8
        %v347 = vpop.permute.xlu0 %346
        %348 = vrot.lane.b32.xlu0 %v331, 8
        %v349 = vpop.permute.xlu0 %348
        %350 = vrot.lane.b32.xlu0 %v332, 8
        %v351 = vpop.permute.xlu0 %350
        %352 = vrot.lane.b32.xlu0 %v333, 8
        %v353 = vpop.permute.xlu0 %352
        %354 = vrot.lane.b32.xlu0 %v334, 8
        %v355 = vpop.permute.xlu0 %354
        %356 = vrot.lane.b32.xlu0 %v335, 8
        %v357 = vpop.permute.xlu0 %356
        %358 = vrot.lane.b32.xlu0 %v336, 8
        %v359 = vpop.permute.xlu0 %358
        %360 = vrot.lane.b32.xlu0 %v337, 8
        %v361 = vpop.permute.xlu0 %360
        %362 = vrot.lane.b32.xlu0 %v338, 8
        %v363 = vpop.permute.xlu0 %362
        %364 = vrot.lane.b32.xlu0 %v339, 8
        %v365 = vpop.permute.xlu0 %364
        %366 = vrot.lane.b32.xlu0 %v340, 8
        %v367 = vpop.permute.xlu0 %366
        %368 = vrot.lane.b32.xlu0 %v341, 8
        %v369 = vpop.permute.xlu0 %368
        %370 = vrot.lane.b32.xlu0 %v342, 8
        %v371 = vpop.permute.xlu0 %370
        %372 = vrot.lane.b32.xlu0 %v343, 8
        %v373 = vpop.permute.xlu0 %372
        %374 = vrot.lane.b32.xlu0 %v344, 8
        %v375 = vpop.permute.xlu0 %374
        %376 = vrot.lane.b32.xlu0 %v345, 8
        %v377 = vpop.permute.xlu0 %376
        %s394 = scalar_lea.vmem [#allocation2], 8
        %vm395 = vcmask 130112
        %396 = vst.msk [vmem:[%s394] sm:$0xff] %vm395, %v347
        %397 = vst.msk [vmem:[%s394 + $0x8] sm:$0xff] %vm395, %v349
        %398 = vst.msk [vmem:[%s394 + $0x10] sm:$0xff] %vm395, %v351
        %399 = vst.msk [vmem:[%s394 + $0x18] sm:$0xff] %vm395, %v353
        %400 = vst.msk [vmem:[%s394 + $0x20] sm:$0xff] %vm395, %v355
        %401 = vst.msk [vmem:[%s394 + $0x28] sm:$0xff] %vm395, %v357
        %402 = vst.msk [vmem:[%s394 + $0x30] sm:$0xff] %vm395, %v359
        %403 = vst.msk [vmem:[%s394 + $0x38] sm:$0xff] %vm395, %v361
        %404 = vst.msk [vmem:[%s394 + $0x40] sm:$0xff] %vm395, %v363
        %405 = vst.msk [vmem:[%s394 + $0x48] sm:$0xff] %vm395, %v365
        %406 = vst.msk [vmem:[%s394 + $0x50] sm:$0xff] %vm395, %v367
        %407 = vst.msk [vmem:[%s394 + $0x58] sm:$0xff] %vm395, %v369
        %408 = vst.msk [vmem:[%s394 + $0x60] sm:$0xff] %vm395, %v371
        %409 = vst.msk [vmem:[%s394 + $0x68] sm:$0xff] %vm395, %v373
        %410 = vst.msk [vmem:[%s394 + $0x70] sm:$0xff] %vm395, %v375
        %411 = vst.msk [vmem:[%s394 + $0x78] sm:$0xff] %vm395, %v377
        %v413 = vshrl.u32 %v330, 16
        %v415 = vrot.slane %v413, 7
        %v416 = vshll.u32 %v330, 16
        %v418 = vor.u32 %v415, %v416
        %v420 = vshrl.u32 %v331, 16
        %v422 = vrot.slane %v420, 7
        %v423 = vshll.u32 %v331, 16
        %v425 = vor.u32 %v422, %v423
        %v427 = vshrl.u32 %v332, 16
        %v429 = vrot.slane %v427, 7
        %v430 = vshll.u32 %v332, 16
        %v432 = vor.u32 %v429, %v430
        %v434 = vshrl.u32 %v333, 16
        %v436 = vrot.slane %v434, 7
        %v437 = vshll.u32 %v333, 16
        %v439 = vor.u32 %v436, %v437
        %v441 = vshrl.u32 %v334, 16
        %v443 = vrot.slane %v441, 7
        %v444 = vshll.u32 %v334, 16
        %v446 = vor.u32 %v443, %v444
        %v448 = vshrl.u32 %v335, 16
        %v450 = vrot.slane %v448, 7
        %v451 = vshll.u32 %v335, 16
        %v453 = vor.u32 %v450, %v451
        %v455 = vshrl.u32 %v336, 16
        %v457 = vrot.slane %v455, 7
        %v458 = vshll.u32 %v336, 16
        %v460 = vor.u32 %v457, %v458
        %v462 = vshrl.u32 %v337, 16
        %v464 = vrot.slane %v462, 7
        %v465 = vshll.u32 %v337, 16
        %v467 = vor.u32 %v464, %v465
        %v469 = vshrl.u32 %v338, 16
        %v471 = vrot.slane %v469, 7
        %v472 = vshll.u32 %v338, 16
        %v474 = vor.u32 %v471, %v472
        %v476 = vshrl.u32 %v339, 16
        %v478 = vrot.slane %v476, 7
        %v479 = vshll.u32 %v339, 16
        %v481 = vor.u32 %v478, %v479
        %v483 = vshrl.u32 %v340, 16
        %v485 = vrot.slane %v483, 7
        %v486 = vshll.u32 %v340, 16
        %v488 = vor.u32 %v485, %v486
        %v490 = vshrl.u32 %v341, 16
        %v492 = vrot.slane %v490, 7
        %v493 = vshll.u32 %v341, 16
        %v495 = vor.u32 %v492, %v493
        %v497 = vshrl.u32 %v342, 16
        %v499 = vrot.slane %v497, 7
        %v500 = vshll.u32 %v342, 16
        %v502 = vor.u32 %v499, %v500
        %v504 = vshrl.u32 %v343, 16
        %v506 = vrot.slane %v504, 7
        %v507 = vshll.u32 %v343, 16
        %v509 = vor.u32 %v506, %v507
        %v511 = vshrl.u32 %v344, 16
        %v513 = vrot.slane %v511, 7
        %v514 = vshll.u32 %v344, 16
        %v516 = vor.u32 %v513, %v514
        %v518 = vshrl.u32 %v345, 16
        %v520 = vrot.slane %v518, 7
        %v521 = vshll.u32 %v345, 16
        %v523 = vor.u32 %v520, %v521
        %vm540 = vcmask 64512
        %vm541 = vsmask.f32 7938
        %vm542 = vmand %vm540, %vm541
        %v543 = vld [vmem:[%s394] sm:$0xff]
        %v544 = vsel %vm542, %v418, %v543
        %545 = vst [vmem:[%s394] sm:$0xff] %v544
        %v546 = vld [vmem:[%s394 + $0x8] sm:$0xff]
        %v547 = vsel %vm542, %v425, %v546
        %548 = vst [vmem:[%s394 + $0x8] sm:$0xff] %v547
        %v549 = vld [vmem:[%s394 + $0x10] sm:$0xff]
        %v550 = vsel %vm542, %v432, %v549
        %551 = vst [vmem:[%s394 + $0x10] sm:$0xff] %v550
        %v552 = vld [vmem:[%s394 + $0x18] sm:$0xff]
        %v553 = vsel %vm542, %v439, %v552
        %554 = vst [vmem:[%s394 + $0x18] sm:$0xff] %v553
        %v555 = vld [vmem:[%s394 + $0x20] sm:$0xff]
        %v556 = vsel %vm542, %v446, %v555
        %557 = vst [vmem:[%s394 + $0x20] sm:$0xff] %v556
        %v558 = vld [vmem:[%s394 + $0x28] sm:$0xff]
        %v559 = vsel %vm542, %v453, %v558
        %560 = vst [vmem:[%s394 + $0x28] sm:$0xff] %v559
        %v561 = vld [vmem:[%s394 + $0x30] sm:$0xff]
        %v562 = vsel %vm542, %v460, %v561
        %563 = vst [vmem:[%s394 + $0x30] sm:$0xff] %v562
        %v564 = vld [vmem:[%s394 + $0x38] sm:$0xff]
        %v565 = vsel %vm542, %v467, %v564
        %566 = vst [vmem:[%s394 + $0x38] sm:$0xff] %v565
        %v567 = vld [vmem:[%s394 + $0x40] sm:$0xff]
        %v568 = vsel %vm542, %v474, %v567
        %569 = vst [vmem:[%s394 + $0x40] sm:$0xff] %v568
        %v570 = vld [vmem:[%s394 + $0x48] sm:$0xff]
        %v571 = vsel %vm542, %v481, %v570
        %572 = vst [vmem:[%s394 + $0x48] sm:$0xff] %v571
        %v573 = vld [vmem:[%s394 + $0x50] sm:$0xff]
        %v574 = vsel %vm542, %v488, %v573
        %575 = vst [vmem:[%s394 + $0x50] sm:$0xff] %v574
        %v576 = vld [vmem:[%s394 + $0x58] sm:$0xff]
        %v577 = vsel %vm542, %v495, %v576
        %578 = vst [vmem:[%s394 + $0x58] sm:$0xff] %v577
        %v579 = vld [vmem:[%s394 + $0x60] sm:$0xff]
        %v580 = vsel %vm542, %v502, %v579
        %581 = vst [vmem:[%s394 + $0x60] sm:$0xff] %v580
        %v582 = vld [vmem:[%s394 + $0x68] sm:$0xff]
        %v583 = vsel %vm542, %v509, %v582
        %584 = vst [vmem:[%s394 + $0x68] sm:$0xff] %v583
        %v585 = vld [vmem:[%s394 + $0x70] sm:$0xff]
        %v586 = vsel %vm542, %v516, %v585
        %587 = vst [vmem:[%s394 + $0x70] sm:$0xff] %v586
        %v588 = vld [vmem:[%s394 + $0x78] sm:$0xff]
        %v589 = vsel %vm542, %v523, %v588
        %590 = vst [vmem:[%s394 + $0x78] sm:$0xff] %v589
        %v591 = vrot.slane %v416, 1
        %v592 = vor.u32 %v413, %v591
        %v593 = vrot.slane %v423, 1
        %v594 = vor.u32 %v420, %v593
        %v595 = vrot.slane %v430, 1
        %v596 = vor.u32 %v427, %v595
        %v597 = vrot.slane %v437, 1
        %v598 = vor.u32 %v434, %v597
        %v599 = vrot.slane %v444, 1
        %v600 = vor.u32 %v441, %v599
        %v601 = vrot.slane %v451, 1
        %v602 = vor.u32 %v448, %v601
        %v603 = vrot.slane %v458, 1
        %v604 = vor.u32 %v455, %v603
        %v605 = vrot.slane %v465, 1
        %v606 = vor.u32 %v462, %v605
        %v607 = vrot.slane %v472, 1
        %v608 = vor.u32 %v469, %v607
        %v609 = vrot.slane %v479, 1
        %v610 = vor.u32 %v476, %v609
        %v611 = vrot.slane %v486, 1
        %v612 = vor.u32 %v483, %v611
        %v613 = vrot.slane %v493, 1
        %v614 = vor.u32 %v490, %v613
        %v615 = vrot.slane %v500, 1
        %v616 = vor.u32 %v497, %v615
        %v617 = vrot.slane %v507, 1
        %v618 = vor.u32 %v504, %v617
        %v619 = vrot.slane %v514, 1
        %v620 = vor.u32 %v511, %v619
        %v621 = vrot.slane %v521, 1
        %v622 = vor.u32 %v518, %v621
        %623 = vrot.lane.b32.xlu0 %v592, 16
        %v624 = vpop.permute.xlu0 %623
        %625 = vrot.lane.b32.xlu0 %v594, 16
        %v626 = vpop.permute.xlu0 %625
        %627 = vrot.lane.b32.xlu0 %v596, 16
        %v628 = vpop.permute.xlu0 %627
        %629 = vrot.lane.b32.xlu0 %v598, 16
        %v630 = vpop.permute.xlu0 %629
        %631 = vrot.lane.b32.xlu0 %v600, 16
        %v632 = vpop.permute.xlu0 %631
        %633 = vrot.lane.b32.xlu0 %v602, 16
        %v634 = vpop.permute.xlu0 %633
        %635 = vrot.lane.b32.xlu0 %v604, 16
        %v636 = vpop.permute.xlu0 %635
        %637 = vrot.lane.b32.xlu0 %v606, 16
        %v638 = vpop.permute.xlu0 %637
        %639 = vrot.lane.b32.xlu0 %v608, 16
        %v640 = vpop.permute.xlu0 %639
        %641 = vrot.lane.b32.xlu0 %v610, 16
        %v642 = vpop.permute.xlu0 %641
        %643 = vrot.lane.b32.xlu0 %v612, 16
        %v644 = vpop.permute.xlu0 %643
        %645 = vrot.lane.b32.xlu0 %v614, 16
        %v646 = vpop.permute.xlu0 %645
        %647 = vrot.lane.b32.xlu0 %v616, 16
        %v648 = vpop.permute.xlu0 %647
        %649 = vrot.lane.b32.xlu0 %v618, 16
        %v650 = vpop.permute.xlu0 %649
        %651 = vrot.lane.b32.xlu0 %v620, 16
        %v652 = vpop.permute.xlu0 %651
        %653 = vrot.lane.b32.xlu0 %v622, 16
        %v654 = vpop.permute.xlu0 %653
        %vm671 = vcmask 195712
        %vm672 = vsmask.f32 7424
        %vm673 = vmand %vm671, %vm672
        %v674 = vld [vmem:[%s394] sm:$0xff]
        %v675 = vsel %vm673, %v624, %v674
        %676 = vst [vmem:[%s394] sm:$0xff] %v675
        %v677 = vld [vmem:[%s394 + $0x8] sm:$0xff]
        %v678 = vsel %vm673, %v626, %v677
        %679 = vst [vmem:[%s394 + $0x8] sm:$0xff] %v678
        %v680 = vld [vmem:[%s394 + $0x10] sm:$0xff]
        %v681 = vsel %vm673, %v628, %v680
        %682 = vst [vmem:[%s394 + $0x10] sm:$0xff] %v681
        %v683 = vld [vmem:[%s394 + $0x18] sm:$0xff]
        %v684 = vsel %vm673, %v630, %v683
        %685 = vst [vmem:[%s394 + $0x18] sm:$0xff] %v684
        %v686 = vld [vmem:[%s394 + $0x20] sm:$0xff]
        %v687 = vsel %vm673, %v632, %v686
        %688 = vst [vmem:[%s394 + $0x20] sm:$0xff] %v687
        %v689 = vld [vmem:[%s394 + $0x28] sm:$0xff]
        %v690 = vsel %vm673, %v634, %v689
        %691 = vst [vmem:[%s394 + $0x28] sm:$0xff] %v690
        %v692 = vld [vmem:[%s394 + $0x30] sm:$0xff]
        %v693 = vsel %vm673, %v636, %v692
        %694 = vst [vmem:[%s394 + $0x30] sm:$0xff] %v693
        %v695 = vld [vmem:[%s394 + $0x38] sm:$0xff]
        %v696 = vsel %vm673, %v638, %v695
        %697 = vst [vmem:[%s394 + $0x38] sm:$0xff] %v696
        %v698 = vld [vmem:[%s394 + $0x40] sm:$0xff]
        %v699 = vsel %vm673, %v640, %v698
        %700 = vst [vmem:[%s394 + $0x40] sm:$0xff] %v699
        %v701 = vld [vmem:[%s394 + $0x48] sm:$0xff]
        %v702 = vsel %vm673, %v642, %v701
        %703 = vst [vmem:[%s394 + $0x48] sm:$0xff] %v702
        %v704 = vld [vmem:[%s394 + $0x50] sm:$0xff]
        %v705 = vsel %vm673, %v644, %v704
        %706 = vst [vmem:[%s394 + $0x50] sm:$0xff] %v705
        %v707 = vld [vmem:[%s394 + $0x58] sm:$0xff]
        %v708 = vsel %vm673, %v646, %v707
        %709 = vst [vmem:[%s394 + $0x58] sm:$0xff] %v708
        %v710 = vld [vmem:[%s394 + $0x60] sm:$0xff]
        %v711 = vsel %vm673, %v648, %v710
        %712 = vst [vmem:[%s394 + $0x60] sm:$0xff] %v711
        %v713 = vld [vmem:[%s394 + $0x68] sm:$0xff]
        %v714 = vsel %vm673, %v650, %v713
        %715 = vst [vmem:[%s394 + $0x68] sm:$0xff] %v714
        %v716 = vld [vmem:[%s394 + $0x70] sm:$0xff]
        %v717 = vsel %vm673, %v652, %v716
        %718 = vst [vmem:[%s394 + $0x70] sm:$0xff] %v717
        %v719 = vld [vmem:[%s394 + $0x78] sm:$0xff]
        %v720 = vsel %vm673, %v654, %v719
        %721 = vst [vmem:[%s394 + $0x78] sm:$0xff] %v720
        %v722 = vld [vmem:[#allocation2] sm:$0xff]
        %v723 = vld [vmem:[#allocation2 + $0x8] sm:$0xff]
        %v724 = vld [vmem:[#allocation2 + $0x10] sm:$0xff]
        %v725 = vld [vmem:[#allocation2 + $0x18] sm:$0xff]
        %v726 = vld [vmem:[#allocation2 + $0x20] sm:$0xff]
        %v727 = vld [vmem:[#allocation2 + $0x28] sm:$0xff]
        %v728 = vld [vmem:[#allocation2 + $0x30] sm:$0xff]
        %v729 = vld [vmem:[#allocation2 + $0x38] sm:$0xff]
        %v730 = vld [vmem:[#allocation2 + $0x40] sm:$0xff]
        %v731 = vld [vmem:[#allocation2 + $0x48] sm:$0xff]
        %v732 = vld [vmem:[#allocation2 + $0x50] sm:$0xff]
        %v733 = vld [vmem:[#allocation2 + $0x58] sm:$0xff]
        %v734 = vld [vmem:[#allocation2 + $0x60] sm:$0xff]
        %v735 = vld [vmem:[#allocation2 + $0x68] sm:$0xff]
        %v736 = vld [vmem:[#allocation2 + $0x70] sm:$0xff]
        %v737 = vld [vmem:[#allocation2 + $0x78] sm:$0xff]
        %v738 = vld [vmem:[%s210] sm:$0xf]
        %v739 = vld [vmem:[%s210 + $0x4] sm:$0xf]
        %v740 = vld [vmem:[%s210 + $0x8] sm:$0xf]
        %v741 = vld [vmem:[%s394] sm:$0xff]
        %v742 = vld [vmem:[%s394 + $0x8] sm:$0xff]
        %v743 = vld [vmem:[%s394 + $0x10] sm:$0xff]
        %v744 = vld [vmem:[%s394 + $0x18] sm:$0xff]
        %v745 = vld [vmem:[%s394 + $0x20] sm:$0xff]
        %v746 = vld [vmem:[%s394 + $0x28] sm:$0xff]
        %v747 = vld [vmem:[%s394 + $0x30] sm:$0xff]
        %v748 = vld [vmem:[%s394 + $0x38] sm:$0xff]
        %v749 = vld [vmem:[%s394 + $0x40] sm:$0xff]
        %v750 = vld [vmem:[%s394 + $0x48] sm:$0xff]
        %v751 = vld [vmem:[%s394 + $0x50] sm:$0xff]
        %v752 = vld [vmem:[%s394 + $0x58] sm:$0xff]
        %v753 = vld [vmem:[%s394 + $0x60] sm:$0xff]
        %v754 = vld [vmem:[%s394 + $0x68] sm:$0xff]
        %v755 = vld [vmem:[%s394 + $0x70] sm:$0xff]
        %v756 = vld [vmem:[%s394 + $0x78] sm:$0xff]
        %s757 = scalar_lea.vmem %s210, 12
        %v758 = vld [vmem:[%s757] sm:$0xf]
        %v759 = vld [vmem:[%s757 + $0x4] sm:$0xf]
        %v760 = vld [vmem:[%s757 + $0x8] sm:$0xf]
        %v764 = vunpack.c.l.b16 %v758
        %v765 = vunpack.c.l.b16 %v759
        %v766 = vunpack.c.l.b16 %v760
        %v767 = vpack.c.b16 %v765, %v764
        %v768 = vpack.c.b16 %v766, %v766
        %v771 = vsel %vm247, %v741, 0
        %v774 = vsel %vm247, %v742, 0
        %v777 = vsel %vm247, %v743, 0
        %v780 = vsel %vm247, %v744, 0
        %v783 = vsel %vm247, %v745, 0
        %v786 = vsel %vm247, %v746, 0
        %v789 = vsel %vm247, %v747, 0
        %v792 = vsel %vm247, %v748, 0
        %v795 = vsel %vm247, %v749, 0
        %v798 = vsel %vm247, %v750, 0
        %v801 = vsel %vm247, %v751, 0
        %v804 = vsel %vm247, %v752, 0
        %v807 = vsel %vm247, %v753, 0
        %v810 = vsel %vm247, %v754, 0
        %v813 = vsel %vm247, %v755, 0
        %v816 = vsel %vm247, %v756, 0
        %vm818 = vcmask 1043456
        %v820 = vsel %vm818, %v768, 0
        %822 = vmatprep.subr.bf16.mxu0 0
        %823 = vmatpush1.bf16.msra.mxu0 %v767
        %824 = vmatprep.subr.bf16.mxu0 0
        %825 = vmatpush1.bf16.msra.mxu0 %v820
        %826 = vmatprep.subr.bf16.mxu0 0
        %827 = vmatpush1.bf16.msra.mxu0 0
        %828 = vmatprep.subr.bf16.mxu0 0
        %829 = vmatpush1.bf16.msra.mxu0 0
        %830 = vmatprep.subr.bf16.mxu0 0
        %831 = vmatpush1.bf16.msra.mxu0 0
        %832 = vmatprep.subr.bf16.mxu0 0
        %833 = vmatpush1.bf16.msra.mxu0 0
        %834 = vmatprep.subr.bf16.mxu0 0
        %835 = vmatpush1.bf16.msra.mxu0 0
        %836 = vmatprep.subr.bf16.mxu0 0
        %837 = vmatpush1.bf16.msra.mxu0 0
        %838 = vmatprep.subr.bf16.mxu0 0
        %839 = vmatpush1.bf16.msra.mxu0 0
        %840 = vmatprep.subr.bf16.mxu0 0
        %841 = vmatpush1.bf16.msra.mxu0 0
        %842 = vmatprep.subr.bf16.mxu0 0
        %843 = vmatpush1.bf16.msra.mxu0 0
        %844 = vmatprep.subr.bf16.mxu0 0
        %845 = vmatpush1.bf16.msra.mxu0 0
        %846 = vmatprep.subr.bf16.mxu0 0
        %847 = vmatpush1.bf16.msra.mxu0 0
        %848 = vmatprep.subr.bf16.mxu0 0
        %849 = vmatpush1.bf16.msra.mxu0 0
        %850 = vmatprep.subr.bf16.mxu0 0
        %851 = vmatpush1.bf16.msra.mxu0 0
        %852 = vmatprep.subr.bf16.mxu0 0
        %853 = vmatpush1.bf16.msra.mxu0 0
        %854 = vmatprep.mubr.bf16.mxu0 0
        %855 = vmatmul.mubr.bf16.gmra.mrb[0].mxu0 %v771
        %v856 = vpop.f32.mrb[0].mxu0
        %v857 = vadd.f32 0.0, %v856
        %v858 = vpop.f32.mrb[0].mxu0
        %v859 = vpop.f32.mrb[0].mxu0
        %v860 = vadd.f32 0.0, %v859
        %v861 = vpop.f32.mrb[0].mxu0
        %862 = vmatprep.mubr.bf16.mxu0 0
        %863 = vmatmul.mubr.bf16.gmra.mrb[0].mxu0 %v774
        %v864 = vpop.f32.mrb[0].mxu0
        %v865 = vadd.f32 0.0, %v864
        %v866 = vpop.f32.mrb[0].mxu0
        %v867 = vpop.f32.mrb[0].mxu0
        %v868 = vadd.f32 0.0, %v867
        %v869 = vpop.f32.mrb[0].mxu0
        %870 = vmatprep.mubr.bf16.mxu0 0
        %871 = vmatmul.mubr.bf16.gmra.mrb[0].mxu0 %v777
        %v872 = vpop.f32.mrb[0].mxu0
        %v873 = vadd.f32 0.0, %v872
        %v874 = vpop.f32.mrb[0].mxu0
        %v875 = vpop.f32.mrb[0].mxu0
        %v876 = vadd.f32 0.0, %v875
        %v877 = vpop.f32.mrb[0].mxu0
        %878 = vmatprep.mubr.bf16.mxu0 0
        %879 = vmatmul.mubr.bf16.gmra.mrb[0].mxu0 %v780
        %v880 = vpop.f32.mrb[0].mxu0
        %v881 = vadd.f32 0.0, %v880
        %v882 = vpop.f32.mrb[0].mxu0
        %v883 = vpop.f32.mrb[0].mxu0
        %v884 = vadd.f32 0.0, %v883
        %v885 = vpop.f32.mrb[0].mxu0
        %886 = vmatprep.mubr.bf16.mxu0 0
        %887 = vmatmul.mubr.bf16.gmra.mrb[0].mxu0 %v783
        %v888 = vpop.f32.mrb[0].mxu0
        %v889 = vadd.f32 0.0, %v888
        %v890 = vpop.f32.mrb[0].mxu0
        %v891 = vpop.f32.mrb[0].mxu0
        %v892 = vadd.f32 0.0, %v891
        %v893 = vpop.f32.mrb[0].mxu0
        %894 = vmatprep.mubr.bf16.mxu0 0
        %895 = vmatmul.mubr.bf16.gmra.mrb[0].mxu0 %v786
        %v896 = vpop.f32.mrb[0].mxu0
        %v897 = vadd.f32 0.0, %v896
        %v898 = vpop.f32.mrb[0].mxu0
        %v899 = vpop.f32.mrb[0].mxu0
        %v900 = vadd.f32 0.0, %v899
        %v901 = vpop.f32.mrb[0].mxu0
        %902 = vmatprep.mubr.bf16.mxu0 0
        %903 = vmatmul.mubr.bf16.gmra.mrb[0].mxu0 %v789
        %v904 = vpop.f32.mrb[0].mxu0
        %v905 = vadd.f32 0.0, %v904
        %v906 = vpop.f32.mrb[0].mxu0
        %v907 = vpop.f32.mrb[0].mxu0
        %v908 = vadd.f32 0.0, %v907
        %v909 = vpop.f32.mrb[0].mxu0
        %910 = vmatprep.mubr.bf16.mxu0 0
        %911 = vmatmul.mubr.bf16.gmra.mrb[0].mxu0 %v792
        %v912 = vpop.f32.mrb[0].mxu0
        %v913 = vadd.f32 0.0, %v912
        %v914 = vpop.f32.mrb[0].mxu0
        %v915 = vpop.f32.mrb[0].mxu0
        %v916 = vadd.f32 0.0, %v915
        %v917 = vpop.f32.mrb[0].mxu0
        %918 = vmatprep.mubr.bf16.mxu0 0
        %919 = vmatmul.mubr.bf16.gmra.mrb[0].mxu0 %v795
        %v920 = vpop.f32.mrb[0].mxu0
        %v921 = vadd.f32 0.0, %v920
        %v922 = vpop.f32.mrb[0].mxu0
        %v923 = vpop.f32.mrb[0].mxu0
        %v924 = vadd.f32 0.0, %v923
        %v925 = vpop.f32.mrb[0].mxu0
        %926 = vmatprep.mubr.bf16.mxu0 0
        %927 = vmatmul.mubr.bf16.gmra.mrb[0].mxu0 %v798
        %v928 = vpop.f32.mrb[0].mxu0
        %v929 = vadd.f32 0.0, %v928
        %v930 = vpop.f32.mrb[0].mxu0
        %v931 = vpop.f32.mrb[0].mxu0
        %v932 = vadd.f32 0.0, %v931
        %v933 = vpop.f32.mrb[0].mxu0
        %934 = vmatprep.mubr.bf16.mxu0 0
        %935 = vmatmul.mubr.bf16.gmra.mrb[0].mxu0 %v801
        %v936 = vpop.f32.mrb[0].mxu0
        %v937 = vadd.f32 0.0, %v936
        %v938 = vpop.f32.mrb[0].mxu0
        %v939 = vpop.f32.mrb[0].mxu0
        %v940 = vadd.f32 0.0, %v939
        %v941 = vpop.f32.mrb[0].mxu0
        %942 = vmatprep.mubr.bf16.mxu0 0
        %943 = vmatmul.mubr.bf16.gmra.mrb[0].mxu0 %v804
        %v944 = vpop.f32.mrb[0].mxu0
        %v945 = vadd.f32 0.0, %v944
        %v946 = vpop.f32.mrb[0].mxu0
        %v947 = vpop.f32.mrb[0].mxu0
        %v948 = vadd.f32 0.0, %v947
        %v949 = vpop.f32.mrb[0].mxu0
        %950 = vmatprep.mubr.bf16.mxu0 0
        %951 = vmatmul.mubr.bf16.gmra.mrb[0].mxu0 %v807
        %v952 = vpop.f32.mrb[0].mxu0
        %v953 = vadd.f32 0.0, %v952
        %v954 = vpop.f32.mrb[0].mxu0
        %v955 = vpop.f32.mrb[0].mxu0
        %v956 = vadd.f32 0.0, %v955
        %v957 = vpop.f32.mrb[0].mxu0
        %958 = vmatprep.mubr.bf16.mxu0 0
        %959 = vmatmul.mubr.bf16.gmra.mrb[0].mxu0 %v810
        %v960 = vpop.f32.mrb[0].mxu0
        %v961 = vadd.f32 0.0, %v960
        %v962 = vpop.f32.mrb[0].mxu0
        %v963 = vpop.f32.mrb[0].mxu0
        %v964 = vadd.f32 0.0, %v963
        %v965 = vpop.f32.mrb[0].mxu0
        %966 = vmatprep.mubr.bf16.mxu0 0
        %967 = vmatmul.mubr.bf16.gmra.mrb[0].mxu0 %v813
        %v968 = vpop.f32.mrb[0].mxu0
        %v969 = vadd.f32 0.0, %v968
        %v970 = vpop.f32.mrb[0].mxu0
        %v971 = vpop.f32.mrb[0].mxu0
        %v972 = vadd.f32 0.0, %v971
        %v973 = vpop.f32.mrb[0].mxu0
        %974 = vmatprep.mubr.bf16.mxu0 0
        %975 = vmatmul.mubr.bf16.gmra.mrb[0].mxu0 %v816
        %v976 = vpop.f32.mrb[0].mxu0
        %v977 = vadd.f32 0.0, %v976
        %v978 = vpop.f32.mrb[0].mxu0
        %v979 = vpop.f32.mrb[0].mxu0
        %v980 = vadd.f32 0.0, %v979
        %v981 = vpop.f32.mrb[0].mxu0
        %982 = vdwg.mxu0
        %v986 = vunpack.c.l.b16 %v738
        %v987 = vunpack.c.l.b16 %v739
        %v988 = vunpack.c.l.b16 %v740
        %v989 = vpack.c.b16 %v987, %v986
        %v990 = vpack.c.b16 %v988, %v988
        %v993 = vsel %vm247, %v722, 0
        %v996 = vsel %vm247, %v723, 0
        %v999 = vsel %vm247, %v724, 0
        %v1002 = vsel %vm247, %v725, 0
        %v1005 = vsel %vm247, %v726, 0
        %v1008 = vsel %vm247, %v727, 0
        %v1011 = vsel %vm247, %v728, 0
        %v1014 = vsel %vm247, %v729, 0
        %v1017 = vsel %vm247, %v730, 0
        %v1020 = vsel %vm247, %v731, 0
        %v1023 = vsel %vm247, %v732, 0
        %v1026 = vsel %vm247, %v733, 0
        %v1029 = vsel %vm247, %v734, 0
        %v1032 = vsel %vm247, %v735, 0
        %v1035 = vsel %vm247, %v736, 0
        %v1038 = vsel %vm247, %v737, 0
        %v1041 = vsel %vm818, %v990, 0
        %1043 = vmatprep.subr.bf16.mxu0 0
        %1044 = vmatpush1.bf16.msra.mxu0 %v989
        %1045 = vmatprep.subr.bf16.mxu0 0
        %1046 = vmatpush1.bf16.msra.mxu0 %v1041
        %1047 = vmatprep.subr.bf16.mxu0 0
        %1048 = vmatpush1.bf16.msra.mxu0 0
        %1049 = vmatprep.subr.bf16.mxu0 0
        %1050 = vmatpush1.bf16.msra.mxu0 0
        %1051 = vmatprep.subr.bf16.mxu0 0
        %1052 = vmatpush1.bf16.msra.mxu0 0
        %1053 = vmatprep.subr.bf16.mxu0 0
        %1054 = vmatpush1.bf16.msra.mxu0 0
        %1055 = vmatprep.subr.bf16.mxu0 0
        %1056 = vmatpush1.bf16.msra.mxu0 0
        %1057 = vmatprep.subr.bf16.mxu0 0
        %1058 = vmatpush1.bf16.msra.mxu0 0
        %1059 = vmatprep.subr.bf16.mxu0 0
        %1060 = vmatpush1.bf16.msra.mxu0 0
        %1061 = vmatprep.subr.bf16.mxu0 0
        %1062 = vmatpush1.bf16.msra.mxu0 0
        %1063 = vmatprep.subr.bf16.mxu0 0
        %1064 = vmatpush1.bf16.msra.mxu0 0
        %1065 = vmatprep.subr.bf16.mxu0 0
        %1066 = vmatpush1.bf16.msra.mxu0 0
        %1067 = vmatprep.subr.bf16.mxu0 0
        %1068 = vmatpush1.bf16.msra.mxu0 0
        %1069 = vmatprep.subr.bf16.mxu0 0
        %1070 = vmatpush1.bf16.msra.mxu0 0
        %1071 = vmatprep.subr.bf16.mxu0 0
        %1072 = vmatpush1.bf16.msra.mxu0 0
        %1073 = vmatprep.subr.bf16.mxu0 0
        %1074 = vmatpush1.bf16.msra.mxu0 0
        %1075 = vmatprep.mubr.bf16.mxu0 0
        %1076 = vmatmul.mubr.bf16.gmra.mrb[0].mxu0 %v993
        %v1077 = vpop.f32.mrb[0].mxu0
        %v1078 = vadd.f32 %v857, %v1077
        %v1079 = vpop.f32.mrb[0].mxu0
        %v1080 = vpop.f32.mrb[0].mxu0
        %v1081 = vadd.f32 %v860, %v1080
        %v1082 = vpop.f32.mrb[0].mxu0
        %1083 = vmatprep.mubr.bf16.mxu0 0
        %1084 = vmatmul.mubr.bf16.gmra.mrb[0].mxu0 %v996
        %v1085 = vpop.f32.mrb[0].mxu0
        %v1086 = vadd.f32 %v865, %v1085
        %v1087 = vpop.f32.mrb[0].mxu0
        %v1088 = vpop.f32.mrb[0].mxu0
        %v1089 = vadd.f32 %v868, %v1088
        %v1090 = vpop.f32.mrb[0].mxu0
        %1091 = vmatprep.mubr.bf16.mxu0 0
        %1092 = vmatmul.mubr.bf16.gmra.mrb[0].mxu0 %v999
        %v1093 = vpop.f32.mrb[0].mxu0
        %v1094 = vadd.f32 %v873, %v1093
        %v1095 = vpop.f32.mrb[0].mxu0
        %v1096 = vpop.f32.mrb[0].mxu0
        %v1097 = vadd.f32 %v876, %v1096
        %v1098 = vpop.f32.mrb[0].mxu0
        %1099 = vmatprep.mubr.bf16.mxu0 0
        %1100 = vmatmul.mubr.bf16.gmra.mrb[0].mxu0 %v1002
        %v1101 = vpop.f32.mrb[0].mxu0
        %v1102 = vadd.f32 %v881, %v1101
        %v1103 = vpop.f32.mrb[0].mxu0
        %v1104 = vpop.f32.mrb[0].mxu0
        %v1105 = vadd.f32 %v884, %v1104
        %v1106 = vpop.f32.mrb[0].mxu0
        %1107 = vmatprep.mubr.bf16.mxu0 0
        %1108 = vmatmul.mubr.bf16.gmra.mrb[0].mxu0 %v1005
        %v1109 = vpop.f32.mrb[0].mxu0
        %v1110 = vadd.f32 %v889, %v1109
        %v1111 = vpop.f32.mrb[0].mxu0
        %v1112 = vpop.f32.mrb[0].mxu0
        %v1113 = vadd.f32 %v892, %v1112
        %v1114 = vpop.f32.mrb[0].mxu0
        %1115 = vmatprep.mubr.bf16.mxu0 0
        %1116 = vmatmul.mubr.bf16.gmra.mrb[0].mxu0 %v1008
        %v1117 = vpop.f32.mrb[0].mxu0
        %v1118 = vadd.f32 %v897, %v1117
        %v1119 = vpop.f32.mrb[0].mxu0
        %v1120 = vpop.f32.mrb[0].mxu0
        %v1121 = vadd.f32 %v900, %v1120
        %v1122 = vpop.f32.mrb[0].mxu0
        %1123 = vmatprep.mubr.bf16.mxu0 0
        %1124 = vmatmul.mubr.bf16.gmra.mrb[0].mxu0 %v1011
        %v1125 = vpop.f32.mrb[0].mxu0
        %v1126 = vadd.f32 %v905, %v1125
        %v1127 = vpop.f32.mrb[0].mxu0
        %v1128 = vpop.f32.mrb[0].mxu0
        %v1129 = vadd.f32 %v908, %v1128
        %v1130 = vpop.f32.mrb[0].mxu0
        %1131 = vmatprep.mubr.bf16.mxu0 0
        %1132 = vmatmul.mubr.bf16.gmra.mrb[0].mxu0 %v1014
        %v1133 = vpop.f32.mrb[0].mxu0
        %v1134 = vadd.f32 %v913, %v1133
        %v1135 = vpop.f32.mrb[0].mxu0
        %v1136 = vpop.f32.mrb[0].mxu0
        %v1137 = vadd.f32 %v916, %v1136
        %v1138 = vpop.f32.mrb[0].mxu0
        %1139 = vmatprep.mubr.bf16.mxu0 0
        %1140 = vmatmul.mubr.bf16.gmra.mrb[0].mxu0 %v1017
        %v1141 = vpop.f32.mrb[0].mxu0
        %v1142 = vadd.f32 %v921, %v1141
        %v1143 = vpop.f32.mrb[0].mxu0
        %v1144 = vpop.f32.mrb[0].mxu0
        %v1145 = vadd.f32 %v924, %v1144
        %v1146 = vpop.f32.mrb[0].mxu0
        %1147 = vmatprep.mubr.bf16.mxu0 0
        %1148 = vmatmul.mubr.bf16.gmra.mrb[0].mxu0 %v1020
        %v1149 = vpop.f32.mrb[0].mxu0
        %v1150 = vadd.f32 %v929, %v1149
        %v1151 = vpop.f32.mrb[0].mxu0
        %v1152 = vpop.f32.mrb[0].mxu0
        %v1153 = vadd.f32 %v932, %v1152
        %v1154 = vpop.f32.mrb[0].mxu0
        %1155 = vmatprep.mubr.bf16.mxu0 0
        %1156 = vmatmul.mubr.bf16.gmra.mrb[0].mxu0 %v1023
        %v1157 = vpop.f32.mrb[0].mxu0
        %v1158 = vadd.f32 %v937, %v1157
        %v1159 = vpop.f32.mrb[0].mxu0
        %v1160 = vpop.f32.mrb[0].mxu0
        %v1161 = vadd.f32 %v940, %v1160
        %v1162 = vpop.f32.mrb[0].mxu0
        %1163 = vmatprep.mubr.bf16.mxu0 0
        %1164 = vmatmul.mubr.bf16.gmra.mrb[0].mxu0 %v1026
        %v1165 = vpop.f32.mrb[0].mxu0
        %v1166 = vadd.f32 %v945, %v1165
        %v1167 = vpop.f32.mrb[0].mxu0
        %v1168 = vpop.f32.mrb[0].mxu0
        %v1169 = vadd.f32 %v948, %v1168
        %v1170 = vpop.f32.mrb[0].mxu0
        %1171 = vmatprep.mubr.bf16.mxu0 0
        %1172 = vmatmul.mubr.bf16.gmra.mrb[0].mxu0 %v1029
        %v1173 = vpop.f32.mrb[0].mxu0
        %v1174 = vadd.f32 %v953, %v1173
        %v1175 = vpop.f32.mrb[0].mxu0
        %v1176 = vpop.f32.mrb[0].mxu0
        %v1177 = vadd.f32 %v956, %v1176
        %v1178 = vpop.f32.mrb[0].mxu0
        %1179 = vmatprep.mubr.bf16.mxu0 0
        %1180 = vmatmul.mubr.bf16.gmra.mrb[0].mxu0 %v1032
        %v1181 = vpop.f32.mrb[0].mxu0
        %v1182 = vadd.f32 %v961, %v1181
        %v1183 = vpop.f32.mrb[0].mxu0
        %v1184 = vpop.f32.mrb[0].mxu0
        %v1185 = vadd.f32 %v964, %v1184
        %v1186 = vpop.f32.mrb[0].mxu0
        %1187 = vmatprep.mubr.bf16.mxu0 0
        %1188 = vmatmul.mubr.bf16.gmra.mrb[0].mxu0 %v1035
        %v1189 = vpop.f32.mrb[0].mxu0
        %v1190 = vadd.f32 %v969, %v1189
        %v1191 = vpop.f32.mrb[0].mxu0
        %v1192 = vpop.f32.mrb[0].mxu0
        %v1193 = vadd.f32 %v972, %v1192
        %v1194 = vpop.f32.mrb[0].mxu0
        %1195 = vmatprep.mubr.bf16.mxu0 0
        %1196 = vmatmul.mubr.bf16.gmra.mrb[0].mxu0 %v1038
        %v1197 = vpop.f32.mrb[0].mxu0
        %v1198 = vadd.f32 %v977, %v1197
        %v1199 = vpop.f32.mrb[0].mxu0
        %v1200 = vpop.f32.mrb[0].mxu0
        %v1201 = vadd.f32 %v980, %v1200
        %v1202 = vpop.f32.mrb[0].mxu0
        %1203 = vdwg.mxu0
        %s1204 = scalar_lea.vmem [#allocation2], 16
        %v1205 = vld [vmem:[%s1204] sm:$0xff]
        %v1206 = vld [vmem:[%s1204 + $0x8] sm:$0xff]
        %v1207 = vld [vmem:[%s1204 + $0x10] sm:$0xff]
        %v1208 = vld [vmem:[%s1204 + $0x18] sm:$0xff]
        %v1209 = vld [vmem:[%s1204 + $0x20] sm:$0xff]
        %v1210 = vld [vmem:[%s1204 + $0x28] sm:$0xff]
        %v1211 = vld [vmem:[%s1204 + $0x30] sm:$0xff]
        %v1212 = vld [vmem:[%s1204 + $0x38] sm:$0xff]
        %v1213 = vld [vmem:[%s1204 + $0x40] sm:$0xff]
        %v1214 = vld [vmem:[%s1204 + $0x48] sm:$0xff]
        %v1215 = vld [vmem:[%s1204 + $0x50] sm:$0xff]
        %v1216 = vld [vmem:[%s1204 + $0x58] sm:$0xff]
        %v1217 = vld [vmem:[%s1204 + $0x60] sm:$0xff]
        %v1218 = vld [vmem:[%s1204 + $0x68] sm:$0xff]
        %v1219 = vld [vmem:[%s1204 + $0x70] sm:$0xff]
        %v1220 = vld [vmem:[%s1204 + $0x78] sm:$0xff]
        %s1221 = scalar_lea.vmem %s210, 24
        %v1222 = vld [vmem:[%s1221] sm:$0xf]
        %v1223 = vld [vmem:[%s1221 + $0x4] sm:$0xf]
        %v1224 = vld [vmem:[%s1221 + $0x8] sm:$0xf]
        %v1228 = vunpack.c.l.b16 %v1222
        %v1229 = vunpack.c.l.b16 %v1223
        %v1230 = vunpack.c.l.b16 %v1224
        %v1231 = vpack.c.b16 %v1229, %v1228
        %v1232 = vpack.c.b16 %v1230, %v1230
        %v1235 = vsel %vm247, %v1205, 0
        %v1238 = vsel %vm247, %v1206, 0
        %v1241 = vsel %vm247, %v1207, 0
        %v1244 = vsel %vm247, %v1208, 0
        %v1247 = vsel %vm247, %v1209, 0
        %v1250 = vsel %vm247, %v1210, 0
        %v1253 = vsel %vm247, %v1211, 0
        %v1256 = vsel %vm247, %v1212, 0
        %v1259 = vsel %vm247, %v1213, 0
        %v1262 = vsel %vm247, %v1214, 0
        %v1265 = vsel %vm247, %v1215, 0
        %v1268 = vsel %vm247, %v1216, 0
        %v1271 = vsel %vm247, %v1217, 0
        %v1274 = vsel %vm247, %v1218, 0
        %v1277 = vsel %vm247, %v1219, 0
        %v1280 = vsel %vm247, %v1220, 0
        %v1283 = vsel %vm818, %v1232, 0
        %1285 = vmatprep.subr.bf16.mxu0 0
        %1286 = vmatpush1.bf16.msra.mxu0 %v1231
        %1287 = vmatprep.subr.bf16.mxu0 0
        %1288 = vmatpush1.bf16.msra.mxu0 %v1283
        %1289 = vmatprep.subr.bf16.mxu0 0
        %1290 = vmatpush1.bf16.msra.mxu0 0
        %1291 = vmatprep.subr.bf16.mxu0 0
        %1292 = vmatpush1.bf16.msra.mxu0 0
        %1293 = vmatprep.subr.bf16.mxu0 0
        %1294 = vmatpush1.bf16.msra.mxu0 0
        %1295 = vmatprep.subr.bf16.mxu0 0
        %1296 = vmatpush1.bf16.msra.mxu0 0
        %1297 = vmatprep.subr.bf16.mxu0 0
        %1298 = vmatpush1.bf16.msra.mxu0 0
        %1299 = vmatprep.subr.bf16.mxu0 0
        %1300 = vmatpush1.bf16.msra.mxu0 0
        %1301 = vmatprep.subr.bf16.mxu0 0
        %1302 = vmatpush1.bf16.msra.mxu0 0
        %1303 = vmatprep.subr.bf16.mxu0 0
        %1304 = vmatpush1.bf16.msra.mxu0 0
        %1305 = vmatprep.subr.bf16.mxu0 0
        %1306 = vmatpush1.bf16.msra.mxu0 0
        %1307 = vmatprep.subr.bf16.mxu0 0
        %1308 = vmatpush1.bf16.msra.mxu0 0
        %1309 = vmatprep.subr.bf16.mxu0 0
        %1310 = vmatpush1.bf16.msra.mxu0 0
        %1311 = vmatprep.subr.bf16.mxu0 0
        %1312 = vmatpush1.bf16.msra.mxu0 0
        %1313 = vmatprep.subr.bf16.mxu0 0
        %1314 = vmatpush1.bf16.msra.mxu0 0
        %1315 = vmatprep.subr.bf16.mxu0 0
        %1316 = vmatpush1.bf16.msra.mxu0 0
        %1317 = vmatprep.mubr.bf16.mxu0 0
        %1318 = vmatmul.mubr.bf16.gmra.mrb[0].mxu0 %v1235
        %v1319 = vpop.f32.mrb[0].mxu0
        %v1320 = vadd.f32 0.0, %v1319
        %v1321 = vpop.f32.mrb[0].mxu0
        %v1322 = vpop.f32.mrb[0].mxu0
        %v1323 = vadd.f32 0.0, %v1322
        %v1324 = vpop.f32.mrb[0].mxu0
        %1325 = vmatprep.mubr.bf16.mxu0 0
        %1326 = vmatmul.mubr.bf16.gmra.mrb[0].mxu0 %v1238
        %v1327 = vpop.f32.mrb[0].mxu0
        %v1328 = vadd.f32 0.0, %v1327
        %v1329 = vpop.f32.mrb[0].mxu0
        %v1330 = vpop.f32.mrb[0].mxu0
        %v1331 = vadd.f32 0.0, %v1330
        %v1332 = vpop.f32.mrb[0].mxu0
        %1333 = vmatprep.mubr.bf16.mxu0 0
        %1334 = vmatmul.mubr.bf16.gmra.mrb[0].mxu0 %v1241
        %v1335 = vpop.f32.mrb[0].mxu0
        %v1336 = vadd.f32 0.0, %v1335
        %v1337 = vpop.f32.mrb[0].mxu0
        %v1338 = vpop.f32.mrb[0].mxu0
        %v1339 = vadd.f32 0.0, %v1338
        %v1340 = vpop.f32.mrb[0].mxu0
        %1341 = vmatprep.mubr.bf16.mxu0 0
        %1342 = vmatmul.mubr.bf16.gmra.mrb[0].mxu0 %v1244
        %v1343 = vpop.f32.mrb[0].mxu0
        %v1344 = vadd.f32 0.0, %v1343
        %v1345 = vpop.f32.mrb[0].mxu0
        %v1346 = vpop.f32.mrb[0].mxu0
        %v1347 = vadd.f32 0.0, %v1346
        %v1348 = vpop.f32.mrb[0].mxu0
        %1349 = vmatprep.mubr.bf16.mxu0 0
        %1350 = vmatmul.mubr.bf16.gmra.mrb[0].mxu0 %v1247
        %v1351 = vpop.f32.mrb[0].mxu0
        %v1352 = vadd.f32 0.0, %v1351
        %v1353 = vpop.f32.mrb[0].mxu0
        %v1354 = vpop.f32.mrb[0].mxu0
        %v1355 = vadd.f32 0.0, %v1354
        %v1356 = vpop.f32.mrb[0].mxu0
        %1357 = vmatprep.mubr.bf16.mxu0 0
        %1358 = vmatmul.mubr.bf16.gmra.mrb[0].mxu0 %v1250
        %v1359 = vpop.f32.mrb[0].mxu0
        %v1360 = vadd.f32 0.0, %v1359
        %v1361 = vpop.f32.mrb[0].mxu0
        %v1362 = vpop.f32.mrb[0].mxu0
        %v1363 = vadd.f32 0.0, %v1362
        %v1364 = vpop.f32.mrb[0].mxu0
        %1365 = vmatprep.mubr.bf16.mxu0 0
        %1366 = vmatmul.mubr.bf16.gmra.mrb[0].mxu0 %v1253
        %v1367 = vpop.f32.mrb[0].mxu0
        %v1368 = vadd.f32 0.0, %v1367
        %v1369 = vpop.f32.mrb[0].mxu0
        %v1370 = vpop.f32.mrb[0].mxu0
        %v1371 = vadd.f32 0.0, %v1370
        %v1372 = vpop.f32.mrb[0].mxu0
        %1373 = vmatprep.mubr.bf16.mxu0 0
        %1374 = vmatmul.mubr.bf16.gmra.mrb[0].mxu0 %v1256
        %v1375 = vpop.f32.mrb[0].mxu0
        %v1376 = vadd.f32 0.0, %v1375
        %v1377 = vpop.f32.mrb[0].mxu0
        %v1378 = vpop.f32.mrb[0].mxu0
        %v1379 = vadd.f32 0.0, %v1378
        %v1380 = vpop.f32.mrb[0].mxu0
        %1381 = vmatprep.mubr.bf16.mxu0 0
        %1382 = vmatmul.mubr.bf16.gmra.mrb[0].mxu0 %v1259
        %v1383 = vpop.f32.mrb[0].mxu0
        %v1384 = vadd.f32 0.0, %v1383
        %v1385 = vpop.f32.mrb[0].mxu0
        %v1386 = vpop.f32.mrb[0].mxu0
        %v1387 = vadd.f32 0.0, %v1386
        %v1388 = vpop.f32.mrb[0].mxu0
        %1389 = vmatprep.mubr.bf16.mxu0 0
        %1390 = vmatmul.mubr.bf16.gmra.mrb[0].mxu0 %v1262
        %v1391 = vpop.f32.mrb[0].mxu0
        %v1392 = vadd.f32 0.0, %v1391
        %v1393 = vpop.f32.mrb[0].mxu0
        %v1394 = vpop.f32.mrb[0].mxu0
        %v1395 = vadd.f32 0.0, %v1394
        %v1396 = vpop.f32.mrb[0].mxu0
        %1397 = vmatprep.mubr.bf16.mxu0 0
        %1398 = vmatmul.mubr.bf16.gmra.mrb[0].mxu0 %v1265
        %v1399 = vpop.f32.mrb[0].mxu0
        %v1400 = vadd.f32 0.0, %v1399
        %v1401 = vpop.f32.mrb[0].mxu0
        %v1402 = vpop.f32.mrb[0].mxu0
        %v1403 = vadd.f32 0.0, %v1402
        %v1404 = vpop.f32.mrb[0].mxu0
        %1405 = vmatprep.mubr.bf16.mxu0 0
        %1406 = vmatmul.mubr.bf16.gmra.mrb[0].mxu0 %v1268
        %v1407 = vpop.f32.mrb[0].mxu0
        %v1408 = vadd.f32 0.0, %v1407
        %v1409 = vpop.f32.mrb[0].mxu0
        %v1410 = vpop.f32.mrb[0].mxu0
        %v1411 = vadd.f32 0.0, %v1410
        %v1412 = vpop.f32.mrb[0].mxu0
        %1413 = vmatprep.mubr.bf16.mxu0 0
        %1414 = vmatmul.mubr.bf16.gmra.mrb[0].mxu0 %v1271
        %v1415 = vpop.f32.mrb[0].mxu0
        %v1416 = vadd.f32 0.0, %v1415
        %v1417 = vpop.f32.mrb[0].mxu0
        %v1418 = vpop.f32.mrb[0].mxu0
        %v1419 = vadd.f32 0.0, %v1418
        %v1420 = vpop.f32.mrb[0].mxu0
        %1421 = vmatprep.mubr.bf16.mxu0 0
        %1422 = vmatmul.mubr.bf16.gmra.mrb[0].mxu0 %v1274
        %v1423 = vpop.f32.mrb[0].mxu0
        %v1424 = vadd.f32 0.0, %v1423
        %v1425 = vpop.f32.mrb[0].mxu0
        %v1426 = vpop.f32.mrb[0].mxu0
        %v1427 = vadd.f32 0.0, %v1426
        %v1428 = vpop.f32.mrb[0].mxu0
        %1429 = vmatprep.mubr.bf16.mxu0 0
        %1430 = vmatmul.mubr.bf16.gmra.mrb[0].mxu0 %v1277
        %v1431 = vpop.f32.mrb[0].mxu0
        %v1432 = vadd.f32 0.0, %v1431
        %v1433 = vpop.f32.mrb[0].mxu0
        %v1434 = vpop.f32.mrb[0].mxu0
        %v1435 = vadd.f32 0.0, %v1434
        %v1436 = vpop.f32.mrb[0].mxu0
        %1437 = vmatprep.mubr.bf16.mxu0 0
        %1438 = vmatmul.mubr.bf16.gmra.mrb[0].mxu0 %v1280
        %v1439 = vpop.f32.mrb[0].mxu0
        %v1440 = vadd.f32 0.0, %v1439
        %v1441 = vpop.f32.mrb[0].mxu0
        %v1442 = vpop.f32.mrb[0].mxu0
        %v1443 = vadd.f32 0.0, %v1442
        %v1444 = vpop.f32.mrb[0].mxu0
        %1445 = vdwg.mxu0
        %v1446 = vadd.f32 %v1078, %v1320
        %v1447 = vadd.f32 %v1081, %v1323
        %v1448 = vadd.f32 %v1086, %v1328
        %v1449 = vadd.f32 %v1089, %v1331
        %v1450 = vadd.f32 %v1094, %v1336
        %v1451 = vadd.f32 %v1097, %v1339
        %v1452 = vadd.f32 %v1102, %v1344
        %v1453 = vadd.f32 %v1105, %v1347
        %v1454 = vadd.f32 %v1110, %v1352
        %v1455 = vadd.f32 %v1113, %v1355
        %v1456 = vadd.f32 %v1118, %v1360
        %v1457 = vadd.f32 %v1121, %v1363
        %v1458 = vadd.f32 %v1126, %v1368
        %v1459 = vadd.f32 %v1129, %v1371
        %v1460 = vadd.f32 %v1134, %v1376
        %v1461 = vadd.f32 %v1137, %v1379
        %v1462 = vadd.f32 %v1142, %v1384
        %v1463 = vadd.f32 %v1145, %v1387
        %v1464 = vadd.f32 %v1150, %v1392
        %v1465 = vadd.f32 %v1153, %v1395
        %v1466 = vadd.f32 %v1158, %v1400
        %v1467 = vadd.f32 %v1161, %v1403
        %v1468 = vadd.f32 %v1166, %v1408
        %v1469 = vadd.f32 %v1169, %v1411
        %v1470 = vadd.f32 %v1174, %v1416
        %v1471 = vadd.f32 %v1177, %v1419
        %v1472 = vadd.f32 %v1182, %v1424
        %v1473 = vadd.f32 %v1185, %v1427
        %v1474 = vadd.f32 %v1190, %v1432
        %v1475 = vadd.f32 %v1193, %v1435
        %v1476 = vadd.f32 %v1198, %v1440
        %v1477 = vadd.f32 %v1201, %v1443
        %v1478 = vld [vmem:[%s213] sm:$0x1]
        %v1480 = vlaneseq
        %v1481 = vshrl.u32 %v1480, 7
        %v1482 = vsub.s32 0, %v1481
        %v1483 = vrot.slane %v1478, %v1482
        %v1485 = vadd.f32 %v1446, %v1483
        %v1486 = vadd.f32 %v1447, %v1483
        %v1487 = vadd.f32 %v1448, %v1483
        %v1488 = vadd.f32 %v1449, %v1483
        %v1489 = vadd.f32 %v1450, %v1483
        %v1490 = vadd.f32 %v1451, %v1483
        %v1491 = vadd.f32 %v1452, %v1483
        %v1492 = vadd.f32 %v1453, %v1483
        %v1493 = vadd.f32 %v1454, %v1483
        %v1494 = vadd.f32 %v1455, %v1483
        %v1495 = vadd.f32 %v1456, %v1483
        %v1496 = vadd.f32 %v1457, %v1483
        %v1497 = vadd.f32 %v1458, %v1483
        %v1498 = vadd.f32 %v1459, %v1483
        %v1499 = vadd.f32 %v1460, %v1483
        %v1500 = vadd.f32 %v1461, %v1483
        %v1501 = vadd.f32 %v1462, %v1483
        %v1502 = vadd.f32 %v1463, %v1483
        %v1503 = vadd.f32 %v1464, %v1483
        %v1504 = vadd.f32 %v1465, %v1483
        %v1505 = vadd.f32 %v1466, %v1483
        %v1506 = vadd.f32 %v1467, %v1483
        %v1507 = vadd.f32 %v1468, %v1483
        %v1508 = vadd.f32 %v1469, %v1483
        %v1509 = vadd.f32 %v1470, %v1483
        %v1510 = vadd.f32 %v1471, %v1483
        %v1511 = vadd.f32 %v1472, %v1483
        %v1512 = vadd.f32 %v1473, %v1483
        %v1513 = vadd.f32 %v1474, %v1483
        %v1514 = vadd.f32 %v1475, %v1483
        %v1515 = vadd.f32 %v1476, %v1483
        %v1516 = vadd.f32 %v1477, %v1483
        %v1517 = vmax.f32 %v1485, 0.0
        %v1518 = vmax.f32 %v1486, 0.0
        %v1519 = vmax.f32 %v1487, 0.0
        %v1520 = vmax.f32 %v1488, 0.0
        %v1521 = vmax.f32 %v1489, 0.0
        %v1522 = vmax.f32 %v1490, 0.0
        %v1523 = vmax.f32 %v1491, 0.0
        %v1524 = vmax.f32 %v1492, 0.0
        %v1525 = vmax.f32 %v1493, 0.0
        %v1526 = vmax.f32 %v1494, 0.0
        %v1527 = vmax.f32 %v1495, 0.0
        %v1528 = vmax.f32 %v1496, 0.0
        %v1529 = vmax.f32 %v1497, 0.0
        %v1530 = vmax.f32 %v1498, 0.0
        %v1531 = vmax.f32 %v1499, 0.0
        %v1532 = vmax.f32 %v1500, 0.0
        %v1533 = vmax.f32 %v1501, 0.0
        %v1534 = vmax.f32 %v1502, 0.0
        %v1535 = vmax.f32 %v1503, 0.0
        %v1536 = vmax.f32 %v1504, 0.0
        %v1537 = vmax.f32 %v1505, 0.0
        %v1538 = vmax.f32 %v1506, 0.0
        %v1539 = vmax.f32 %v1507, 0.0
        %v1540 = vmax.f32 %v1508, 0.0
        %v1541 = vmax.f32 %v1509, 0.0
        %v1542 = vmax.f32 %v1510, 0.0
        %v1543 = vmax.f32 %v1511, 0.0
        %v1544 = vmax.f32 %v1512, 0.0
        %v1545 = vmax.f32 %v1513, 0.0
        %v1546 = vmax.f32 %v1514, 0.0
        %v1547 = vmax.f32 %v1515, 0.0
        %v1548 = vmax.f32 %v1516, 0.0
        %vm1549 = vcmask 523264
        %1550 = vst.msk [vmem:[%s201] sm:$0xff] %vm1549, %v1517
        %1551 = vst.msk [vmem:[%s201 + $0x8] sm:$0xff] %vm1549, %v1518
        %1552 = vst.msk [vmem:[%s201 + $0x10] sm:$0xff] %vm1549, %v1519
        %1553 = vst.msk [vmem:[%s201 + $0x18] sm:$0xff] %vm1549, %v1520
        %1554 = vst.msk [vmem:[%s201 + $0x20] sm:$0xff] %vm1549, %v1521
        %1555 = vst.msk [vmem:[%s201 + $0x28] sm:$0xff] %vm1549, %v1522
        %1556 = vst.msk [vmem:[%s201 + $0x30] sm:$0xff] %vm1549, %v1523
        %1557 = vst.msk [vmem:[%s201 + $0x38] sm:$0xff] %vm1549, %v1524
        %1558 = vst.msk [vmem:[%s201 + $0x40] sm:$0xff] %vm1549, %v1525
        %1559 = vst.msk [vmem:[%s201 + $0x48] sm:$0xff] %vm1549, %v1526
        %1560 = vst.msk [vmem:[%s201 + $0x50] sm:$0xff] %vm1549, %v1527
        %1561 = vst.msk [vmem:[%s201 + $0x58] sm:$0xff] %vm1549, %v1528
        %1562 = vst.msk [vmem:[%s201 + $0x60] sm:$0xff] %vm1549, %v1529
        %1563 = vst.msk [vmem:[%s201 + $0x68] sm:$0xff] %vm1549, %v1530
        %1564 = vst.msk [vmem:[%s201 + $0x70] sm:$0xff] %vm1549, %v1531
        %1565 = vst.msk [vmem:[%s201 + $0x78] sm:$0xff] %vm1549, %v1532
        %1566 = vst.msk [vmem:[%s201 + $0x80] sm:$0xff] %vm1549, %v1533
        %1567 = vst.msk [vmem:[%s201 + $0x88] sm:$0xff] %vm1549, %v1534
        %1568 = vst.msk [vmem:[%s201 + $0x90] sm:$0xff] %vm1549, %v1535
        %1569 = vst.msk [vmem:[%s201 + $0x98] sm:$0xff] %vm1549, %v1536
        %1570 = vst.msk [vmem:[%s201 + $0xa0] sm:$0xff] %vm1549, %v1537
        %1571 = vst.msk [vmem:[%s201 + $0xa8] sm:$0xff] %vm1549, %v1538
        %1572 = vst.msk [vmem:[%s201 + $0xb0] sm:$0xff] %vm1549, %v1539
        %1573 = vst.msk [vmem:[%s201 + $0xb8] sm:$0xff] %vm1549, %v1540
        %1574 = vst.msk [vmem:[%s201 + $0xc0] sm:$0xff] %vm1549, %v1541
        %1575 = vst.msk [vmem:[%s201 + $0xc8] sm:$0xff] %vm1549, %v1542
        %1576 = vst.msk [vmem:[%s201 + $0xd0] sm:$0xff] %vm1549, %v1543
        %1577 = vst.msk [vmem:[%s201 + $0xd8] sm:$0xff] %vm1549, %v1544
        %1578 = vst.msk [vmem:[%s201 + $0xe0] sm:$0xff] %vm1549, %v1545
        %1579 = vst.msk [vmem:[%s201 + $0xe8] sm:$0xff] %vm1549, %v1546
        %1580 = vst.msk [vmem:[%s201 + $0xf0] sm:$0xff] %vm1549, %v1547
        %1581 = vst.msk [vmem:[%s201 + $0xf8] sm:$0xff] %vm1549, %v1548
        %s1582 = sand.u32 %s117, 1
        %s1583 = scalar_lea.sflag [#allocation4], %s1582
        %s1584 = sand.u32 %s117, 1
        %s1585 = smul.addr %s1584, 256
        %s1586 = scalar_lea.vmem [#allocation3], %s1585
        // Predicated region
        $region33: #{tpu_custom_call.1} parent=31 // pred_check
          %p1587 = pneg %p127
        $region34: #{tpu_custom_call.1} parent=31 // pred_check_branch
          %1589 = sbr.rel (%p1587) target = $region36
        $region35: #{tpu_custom_call.1} parent=31 // pred_region
          %s1591 = ssub.s32 4096, 4096
          %1592 = vsyncadd %s1583, %s1591
          %s1593 = smul.addr %s21, 32
          %s1594 = sadd.s32 %s22, %s1593
          %s1595 = smul.addr %s1594, 128
          %s1596 = scalar_lea.hbm %s3, %s1595
          %s1597 = sshll.u32 %s1586, 4
          %s1598 = int_to_ptr.vmem [resolvable:$true] %s1597
          %1603 = dma.vmem_to_hbm [thread:$0]  %s1598, 4096, %s1596, %s1583, 128, 128, 8
        $region36: #{tpu_custom_call.1} parent=31 // pred_fallthru
          _
      $region32: #{tpu_custom_call.1} parent=5 // pred_fallthru
        _
      %p1604 = scmp.le.s32.totalorder 2, %s12
      // Predicated region
      $region37: #{tpu_custom_call.1} parent=5 // pred_check
        %p1605 = pneg %p1604
      $region38: #{tpu_custom_call.1} parent=5 // pred_check_branch
        %1607 = sbr.rel (%p1605) target = $region40
      $region39: #{tpu_custom_call.1} parent=5 // pred_region
        %s1608 = ssub.s32 %s12, 2
        // Predicated region
        $region41: #{tpu_custom_call.1} parent=39 // pred_check
          %p1609 = pneg %p133
        $region42: #{tpu_custom_call.1} parent=39 // pred_check_branch
          %1611 = sbr.rel (%p1609) target = $region44
        $region43: #{tpu_custom_call.1} parent=39 // pred_region
          %s1612 = sand.u32 %s118, 1
          %s1613 = scalar_lea.sflag [#allocation4], %s1612
          %s1614 = sand.u32 %s118, 1
          %s1615 = smul.addr %s1614, 256
          %s1616 = scalar_lea.vmem [#allocation3], %s1615
          %1617 = dma.done %s1613, 4096
        $region44: #{tpu_custom_call.1} parent=39 // pred_fallthru
          _
      $region40: #{tpu_custom_call.1} parent=5 // pred_fallthru
        _
    $region6: #{tpu_custom_call.1} parent=1 // loop_footer
      %s16 = sadd.s32 1, %s12
    $region7: #{tpu_custom_call.1} parent=1 // loop_footer_branch
      %11 = sbr.rel target = $region3
    $region8: #{tpu_custom_call.1} parent=1 // loop_exit
      _
    %1618 = vsyncpa [#allocation4], 1
    %s1619 = scalar_lea.sflag [#allocation4], 1
    %1620 = vsyncpa %s1619, 1

</llo_original>
